<compile_context>
chip_gen: v5e
topology: v5e:2x2
jax: 0.10.0
libtpu: 0.0.40
codegen_flags: <defaults>
</compile_context>

<pallas_src>
import functools

import jax
import jax.numpy as jnp
from jax.experimental import pallas as pl
from jax.experimental.pallas import tpu as pltpu


def _vmem_budget_bytes():
    """~75% of physical VMEM (v5e/v6e: 128 MiB -> 96 MiB; v7x: 64 MiB -> 48 MiB)."""
    try:
        cap = int(pltpu.get_tpu_info().vmem_capacity_bytes)
    except Exception:
        cap = 64 << 20            # conservative fallback, safe on every gen
    return min(cap * 3 // 4, 96 << 20)


# ----------------------------------------------------------------------------
# Kernel: all kh*kw (or kt) taps accumulated in one invocation, f32 register
# accumulator, single store, fused BN (+residual) (+ReLU) epilogue.
# ----------------------------------------------------------------------------
def _conv_kernel(x_ref, w_ref, sc_ref, sh_ref, *rest, taps, Ho, Wo, relu,
                 has_res):
    if has_res:
        res_ref, o_ref = rest
    else:
        (o_ref,) = rest
    nb = o_ref.shape[0]
    cin = x_ref.shape[-1]
    m = nb * Ho * Wo
    acc = None
    for t, (oh, ow) in enumerate(taps):        # static tap loop, register acc
        a = x_ref[:, oh:oh + Ho, ow:ow + Wo, :].reshape(m, cin)
        d = jnp.dot(a, w_ref[t], preferred_element_type=jnp.float32)
        acc = d if acc is None else acc + d
    y = acc * sc_ref[...] + sh_ref[...]        # fused inference-mode BN (f32)
    if has_res:
        y = y + res_ref[...].reshape(m, -1).astype(jnp.float32)
    if relu:
        y = jnp.maximum(y, 0.0)
    o_ref[...] = y.reshape(o_ref.shape).astype(o_ref.dtype)


# ----------------------------------------------------------------------------
# Core wrapper shared by the 2-D convs and the 3-D frontend conv.
# ----------------------------------------------------------------------------
def _pick_nb(NB, per_nb, fixed, budget, need_split):
    cap = max(1, (budget - fixed) // max(per_nb, 1))
    if need_split:                       # keep >=2 parallel grid points (v7x)
        cap = min(cap, max(1, NB // 2))
    cap = int(min(cap, NB))
    for d in range(cap, 0, -1):
        if NB % d == 0:
            return d
    return 1


def _conv_core(xp, w_taps, scale, shift, taps, Ho, Wo, residual=None,
               relu=True):
    """xp: (NB, Hx, Wx, Cin) bf16 (already padded / phase-reordered);
    w_taps: (ntap, Cin, Cout) bf16; taps: static ((oh, ow), ...);
    output: (NB, Ho, Wo, Cout) bf16."""
    NB, Hx, Wx, Cin = xp.shape
    ntap, _, Cout = w_taps.shape
    has_res = residual is not None
    tn = Cout if Cout <= 256 else 256
    n_j = Cout // tn

    budget = _vmem_budget_bytes()
    x_img = Hx * Wx * Cin * 2
    o_img = Ho * Wo * tn * 2
    tmp = x_img + Ho * Wo * (2 * Cin * 2 + 3 * tn * 4)   # in-kernel temporaries
    per_nb = 2 * x_img + (2 + 2 * has_res) * o_img + tmp
    fixed = 2 * ntap * Cin * tn * 2 + (2 << 20)
    nb = _pick_nb(NB, per_nb, fixed, budget, need_split=(n_j < 2))

    grid = (n_j, NB // nb)
    in_specs = [
        pl.BlockSpec((nb, Hx, Wx, Cin), lambda j, b: (b, 0, 0, 0)),
        pl.BlockSpec((ntap, Cin, tn), lambda j, b: (0, 0, j)),
        pl.BlockSpec((1, tn), lambda j, b: (0, j)),
        pl.BlockSpec((1, tn), lambda j, b: (0, j)),
    ]
    args = [xp, w_taps, scale, shift]
    if has_res:
        in_specs.append(
            pl.BlockSpec((nb, Ho, Wo, tn), lambda j, b: (b, 0, 0, j)))
        args.append(residual)

    flops = 2 * NB * Ho * Wo * ntap * Cin * Cout
    bytes_accessed = (n_j * xp.size * 2 + (NB // nb) * w_taps.size * 2
                      + (1 + 2 * has_res) * NB * Ho * Wo * Cout * 2)

    return pl.pallas_call(
        functools.partial(_conv_kernel, taps=tuple(taps), Ho=Ho, Wo=Wo,
                          relu=relu, has_res=has_res),
        out_shape=jax.ShapeDtypeStruct((NB, Ho, Wo, Cout), jnp.bfloat16),
        grid=grid,
        in_specs=in_specs,
        out_specs=pl.BlockSpec((nb, Ho, Wo, tn), lambda j, b: (b, 0, 0, j)),
        compiler_params=pltpu.CompilerParams(
            dimension_semantics=("parallel", "parallel"),
            vmem_limit_bytes=budget),
        cost_estimate=pl.CostEstimate(flops=flops, transcendentals=0,
                                      bytes_accessed=bytes_accessed),
    )(*args)


# ----------------------------------------------------------------------------
# Conv wrappers (stride 1 and stride 2 share the same kernel).
# ----------------------------------------------------------------------------
def conv2d(x, w, scale, shift, residual=None, relu=True, stride=1):
    """PyTorch-style conv (pad=k//2) + fused BN (+residual) (+ReLU).
    x: (NB, H, W, Cin) bf16; w: (kh, kw, Cin, Cout) bf16; stride in {1, 2}."""
    NB, H, W, Cin = x.shape
    kh, kw, _, Cout = w.shape
    ph, pw = kh // 2, kw // 2
    xp = jnp.pad(x, ((0, 0), (ph, ph), (pw, pw), (0, 0))) if (ph or pw) else x
    Hp, Wp = H + 2 * ph, W + 2 * pw
    if stride == 1:
        Ho, Wo = H, W
        taps = [(i, j) for i in range(kh) for j in range(kw)]
    else:  # stride 2: phase-reorder so every tap is a contiguous window
        Ho = (H + 2 * ph - kh) // 2 + 1
        Wo = (W + 2 * pw - kw) // 2 + 1
        He, We = (Hp + 1) // 2, (Wp + 1) // 2
        xp = jnp.pad(xp, ((0, 0), (0, 2 * He - Hp), (0, 2 * We - Wp), (0, 0)))
        xp = jnp.concatenate([xp[:, 0::2], xp[:, 1::2]], axis=1)
        xp = jnp.concatenate([xp[:, :, 0::2], xp[:, :, 1::2]], axis=2)
        taps = [((i % 2) * He + i // 2, (j % 2) * We + j // 2)
                for i in range(kh) for j in range(kw)]
    w_taps = w.reshape(kh * kw, Cin, Cout)
    return _conv_core(xp, w_taps, scale, shift, taps, Ho, Wo,
                      residual=residual, relu=relu)


def conv3d_bn_relu(x, w, scale, shift):
    """Conv3d(3->64, k=(5,3,3), stride 1, pad (2,1,1)) + BN + ReLU.
    x: (B, T, H, W, 3) bf16; w: (5, 3, 3, 3, 64) bf16.
    The 3x3 spatial taps are folded into channels in XLA (3 -> 27 channels);
    the kt=5 temporal reduction runs in-kernel as taps of the conv kernel."""
    B, T, H, W, Cin = x.shape
    kt, kh, kw = w.shape[0], w.shape[1], w.shape[2]
    Cout = w.shape[-1]
    xp = jnp.pad(x, ((0, 0), (0, 0), (kh // 2, kh // 2),
                     (kw // 2, kw // 2), (0, 0)))
    x27 = jnp.concatenate([xp[:, :, i:i + H, j:j + W, :]
                           for i in range(kh) for j in range(kw)], axis=-1)
    x27 = x27.reshape(B, T, H * W, kh * kw * Cin)
    x27 = jnp.pad(x27, ((0, 0), (kt // 2, kt // 2), (0, 0), (0, 0)))
    w_taps = w.reshape(kt, kh * kw * Cin, Cout)
    taps = [(dt, 0) for dt in range(kt)]
    out = _conv_core(x27, w_taps, scale, shift, taps, Ho=T, Wo=H * W,
                     relu=True)
    return out.reshape(B * T, H, W, Cout)


def maxpool2d_3x3_s2(x):
    """MaxPool2d(3, stride=2, padding=1) as a tree of XLA maxima."""
    NB, H, W, C = x.shape
    Ho = (H + 2 - 3) // 2 + 1
    Wo = (W + 2 - 3) // 2 + 1
    xp = jnp.pad(x, ((0, 0), (1, 1), (1, 1), (0, 0)),
                 constant_values=-jnp.inf)
    out = None
    for i in range(3):
        for j in range(3):
            s = xp[:, i:i + Ho * 2:2, j:j + Wo * 2:2, :]
            out = s if out is None else jnp.maximum(out, s)
    return out


# ----------------------------------------------------------------------------
# Parameters (deterministic synthetic init, kernel-ready layouts, bf16 weights)
# ----------------------------------------------------------------------------
def _conv_w_hwio(key, cout, cin, kh, kw):
    fan_in = cin * kh * kw
    w = jax.random.normal(key, (kh, kw, cin, cout), jnp.float32)
    return (w * (2.0 / fan_in) ** 0.5).astype(jnp.bfloat16)


def _bn_params(key, c, eps=1e-5):
    k1, k2, k3, k4 = jax.random.split(key, 4)
    gamma = 1.0 + 0.05 * jax.random.normal(k1, (c,), jnp.float32)
    beta = 0.05 * jax.random.normal(k2, (c,), jnp.float32)
    mean = 0.05 * jax.random.normal(k3, (c,), jnp.float32)
    var = 1.0 + 0.05 * jax.random.uniform(k4, (c,), jnp.float32)
    scale = gamma / jnp.sqrt(var + eps)
    shift = beta - mean * scale
    return scale.reshape(1, c), shift.reshape(1, c)


def make_params(key):
    keys = iter(jax.random.split(key, 128))
    p = {}
    # frontend3D: Conv3d(3,64,(5,3,3),pad=(2,1,1),bias=False) + BN3d(eps=1e-3) + ReLU
    w3 = jax.random.normal(next(keys), (5, 3, 3, 3, 64), jnp.float32)
    p['f3d_w'] = (w3 * (2.0 / (5 * 3 * 3 * 3)) ** 0.5).astype(jnp.bfloat16)
    p['f3d_scale'], p['f3d_shift'] = _bn_params(next(keys), 64, eps=1e-3)
    # ResNet-18 with conv1 replaced by Conv2d(64,64,3,stride=1,pad=1,bias=False)
    p['conv1_w'] = _conv_w_hwio(next(keys), 64, 64, 3, 3)
    p['bn1_scale'], p['bn1_shift'] = _bn_params(next(keys), 64)

    def make_layer(cin, cout, stride):
        blocks = []
        for b in range(2):
            s = stride if b == 0 else 1
            inp = cin if b == 0 else cout
            blk = {'stride': s,
                   'conv1_w': _conv_w_hwio(next(keys), cout, inp, 3, 3)}
            blk['bn1_scale'], blk['bn1_shift'] = _bn_params(next(keys), cout)
            blk['conv2_w'] = _conv_w_hwio(next(keys), cout, cout, 3, 3)
            blk['bn2_scale'], blk['bn2_shift'] = _bn_params(next(keys), cout)
            if s != 1 or inp != cout:
                blk['down_w'] = _conv_w_hwio(next(keys), cout, inp, 1, 1)
                blk['dbn_scale'], blk['dbn_shift'] = _bn_params(next(keys), cout)
            blocks.append(blk)
        return blocks

    p['layer1'] = make_layer(64, 64, 1)
    p['layer2'] = make_layer(64, 128, 2)
    p['layer3'] = make_layer(128, 256, 2)
    p['layer4'] = make_layer(256, 512, 2)
    return p


# ----------------------------------------------------------------------------
# Forward pass
# ----------------------------------------------------------------------------
def basic_block(x, blk):
    s = blk['stride']
    out = conv2d(x, blk['conv1_w'], blk['bn1_scale'], blk['bn1_shift'],
                 relu=True, stride=s)
    identity = x
    if 'down_w' in blk:
        identity = conv2d(x, blk['down_w'], blk['dbn_scale'], blk['dbn_shift'],
                          relu=False, stride=s)
    # out = relu(bn2(conv2(out)) + identity), residual fused in the epilogue.
    out = conv2d(out, blk['conv2_w'], blk['bn2_scale'], blk['bn2_shift'],
                 residual=identity, relu=True, stride=1)
    return out


def visual_frontend_forward(input_batch, params, mask=None):
    """input_batch: (B, T, 3, H, W) float32 (same as the PyTorch module)."""
    B, T, C, H, W = input_batch.shape
    x = jnp.transpose(input_batch, (0, 1, 3, 4, 2)).astype(jnp.bfloat16)
    y = conv3d_bn_relu(x, params['f3d_w'], params['f3d_scale'],
                       params['f3d_shift'])                  # (B*T, H, W, 64)
    # ResNet-18 trunk (fc removed, avgpool kept).
    y = conv2d(y, params['conv1_w'], params['bn1_scale'], params['bn1_shift'],
               relu=True)
    y = maxpool2d_3x3_s2(y)
    for layer in ('layer1', 'layer2', 'layer3', 'layer4'):
        for blk in params[layer]:
            y = basic_block(y, blk)
    y = jnp.mean(y.astype(jnp.float32), axis=(1, 2))          # AdaptiveAvgPool
    y = y.reshape(B, T, -1)
    if mask is not None:
        y = y * mask
    return y


# ----------------------------------------------------------------------------
# Reference (XLA) convs for spot-checking the Pallas kernels
# ----------------------------------------------------------------------------
def _ref_conv2d(x, w, scale, shift, residual=None, relu=True, stride=1):
    ph, pw = w.shape[0] // 2, w.shape[1] // 2
    y = jax.lax.conv_general_dilated(
        x.astype(jnp.float32), w.astype(jnp.float32),
        window_strides=(stride, stride),
        padding=((ph, ph), (pw, pw)),
        dimension_numbers=('NHWC', 'HWIO', 'NHWC'),
        preferred_element_type=jnp.float32)
    y = y * scale.reshape(1, 1, 1, -1) + shift.reshape(1, 1, 1, -1)
    if residual is not None:
        y = y + residual.astype(jnp.float32)
    if relu:
        y = jnp.maximum(y, 0.0)
    return y


def _rel_err(got, want):
    return float(jnp.max(jnp.abs(got - want)) / (jnp.max(jnp.abs(want)) + 1e-6))


# ----------------------------------------------------------------------------
if __name__ == "__main__":
    key = jax.random.PRNGKey(0)
    k_in, k_par = jax.random.split(key)

    # --- quick correctness spot-checks vs. XLA convolutions (loose bf16 tol) --
    kc = jax.random.split(k_par, 8)
    xs = jax.random.normal(kc[0], (2, 8, 8, 64), jnp.float32).astype(jnp.bfloat16)
    ws = (0.05 * jax.random.normal(kc[1], (3, 3, 64, 128), jnp.float32)
          ).astype(jnp.bfloat16)
    sc = 1.0 + 0.1 * jax.random.normal(kc[2], (1, 128), jnp.float32)
    sh = 0.1 * jax.random.normal(kc[3], (1, 128), jnp.float32)
    for stride in (1, 2):
        got = conv2d(xs, ws, sc, sh, relu=True, stride=stride).astype(jnp.float32)
        want = _ref_conv2d(xs, ws, sc, sh, relu=True, stride=stride)
        assert _rel_err(got, want) < 5e-2, ("conv2d", stride)

    x3 = jax.random.normal(kc[4], (2, 4, 8, 8, 3), jnp.float32).astype(jnp.bfloat16)
    w3 = (0.05 * jax.random.normal(kc[5], (5, 3, 3, 3, 64), jnp.float32)
          ).astype(jnp.bfloat16)
    ones = jnp.ones((1, 64), jnp.float32)
    zeros = jnp.zeros((1, 64), jnp.float32)
    got3 = conv3d_bn_relu(x3, w3, ones, zeros).astype(jnp.float32)
    want3 = jax.lax.conv_general_dilated(
        x3.astype(jnp.float32), w3.astype(jnp.float32),
        window_strides=(1, 1, 1), padding=((2, 2), (1, 1), (1, 1)),
        dimension_numbers=('NDHWC', 'DHWIO', 'NDHWC'),
        preferred_element_type=jnp.float32)
    want3 = jnp.maximum(want3, 0.0).reshape(8, 8, 8, 64)
    assert _rel_err(got3, want3) < 5e-2, "conv3d"

    # --- full forward -------------------------------------------------------
    B, T, C, H, W = 2, 4, 3, 16, 16
    input_batch = jax.random.normal(k_in, (B, T, C, H, W), jnp.float32)
    params = make_params(k_par)

    fwd = jax.jit(lambda ib: visual_frontend_forward(ib, params))
    out = jax.block_until_ready(fwd(input_batch))
    assert out.shape == (B, T, 512), out.shape
    assert bool(jnp.all(jnp.isfinite(out)))
    print("KERNEL_OK")
</pallas_src>

<mosaic_0001>
module attributes {stable_mosaic.version = 11 : i64} {
  func.func @_conv_kernel(%arg0: i32, %arg1: i32, %arg2: memref<1x10x10x64xbf16, #tpu.memory_space<vmem>>, %arg3: memref<9x64x128xbf16, #tpu.memory_space<vmem>>, %arg4: memref<1x128xf32, #tpu.memory_space<vmem>>, %arg5: memref<1x128xf32, #tpu.memory_space<vmem>>, %arg6: memref<1x8x8x128xbf16, #tpu.memory_space<vmem>>) attributes {dimension_semantics = [#tpu.dimension_semantics<parallel>, #tpu.dimension_semantics<parallel>], iteration_bounds = array<i64: 1, 2>, scalar_prefetch = 0 : i64, scratch_operands = 0 : i64, tpu.core_type = #tpu.core_type<tc>, window_params = [{transform_indices = @transform_0, window_bounds = array<i64: 1, 10, 10, 64>}, {transform_indices = @transform_1, window_bounds = array<i64: 9, 64, 128>}, {transform_indices = @transform_2, window_bounds = array<i64: 1, 128>}, {transform_indices = @transform_3, window_bounds = array<i64: 1, 128>}, {transform_indices = @transform_4, window_bounds = array<i64: 1, 8, 8, 128>}]} {
    %c0 = arith.constant 0 : index
    %c0_0 = arith.constant 0 : index
    %c0_1 = arith.constant 0 : index
    %c0_2 = arith.constant 0 : index
    %0 = vector.load %arg2[%c0, %c0_0, %c0_1, %c0_2] : memref<1x10x10x64xbf16, #tpu.memory_space<vmem>>, vector<1x8x8x64xbf16>
    %1 = vector.shape_cast %0 : vector<1x8x8x64xbf16> to vector<64x64xbf16>
    %c0_3 = arith.constant 0 : index
    %c0_4 = arith.constant 0 : index
    %c0_5 = arith.constant 0 : index
    %2 = vector.load %arg3[%c0_3, %c0_4, %c0_5] : memref<9x64x128xbf16, #tpu.memory_space<vmem>>, vector<1x64x128xbf16>
    %3 = vector.shape_cast %2 : vector<1x64x128xbf16> to vector<64x128xbf16>
    %cst = arith.constant dense<0.000000e+00> : vector<64x128xf32>
    %4 = tpu.matmul %1, %3, %cst {dimension_numbers = #tpu.dot_dimension_numbers<[1], [0], [0], [1], [0, 0, 1, 1], [], []>} : vector<64x64xbf16>, vector<64x128xbf16>, vector<64x128xf32> -> vector<64x128xf32>
    %c0_6 = arith.constant 0 : index
    %c0_7 = arith.constant 0 : index
    %c1 = arith.constant 1 : index
    %c0_8 = arith.constant 0 : index
    %5 = vector.load %arg2[%c0_6, %c0_7, %c1, %c0_8] : memref<1x10x10x64xbf16, #tpu.memory_space<vmem>>, vector<1x8x8x64xbf16>
    %6 = vector.shape_cast %5 : vector<1x8x8x64xbf16> to vector<64x64xbf16>
    %c1_9 = arith.constant 1 : index
    %c0_10 = arith.constant 0 : index
    %c0_11 = arith.constant 0 : index
    %7 = vector.load %arg3[%c1_9, %c0_10, %c0_11] : memref<9x64x128xbf16, #tpu.memory_space<vmem>>, vector<1x64x128xbf16>
    %8 = vector.shape_cast %7 : vector<1x64x128xbf16> to vector<64x128xbf16>
    %cst_12 = arith.constant dense<0.000000e+00> : vector<64x128xf32>
    %9 = tpu.matmul %6, %8, %cst_12 {dimension_numbers = #tpu.dot_dimension_numbers<[1], [0], [0], [1], [0, 0, 1, 1], [], []>} : vector<64x64xbf16>, vector<64x128xbf16>, vector<64x128xf32> -> vector<64x128xf32>
    %10 = arith.addf %4, %9 : vector<64x128xf32>
    %c0_13 = arith.constant 0 : index
    %c0_14 = arith.constant 0 : index
    %c2 = arith.constant 2 : index
    %c0_15 = arith.constant 0 : index
    %11 = vector.load %arg2[%c0_13, %c0_14, %c2, %c0_15] : memref<1x10x10x64xbf16, #tpu.memory_space<vmem>>, vector<1x8x8x64xbf16>
    %12 = vector.shape_cast %11 : vector<1x8x8x64xbf16> to vector<64x64xbf16>
    %c2_16 = arith.constant 2 : index
    %c0_17 = arith.constant 0 : index
    %c0_18 = arith.constant 0 : index
    %13 = vector.load %arg3[%c2_16, %c0_17, %c0_18] : memref<9x64x128xbf16, #tpu.memory_space<vmem>>, vector<1x64x128xbf16>
    %14 = vector.shape_cast %13 : vector<1x64x128xbf16> to vector<64x128xbf16>
    %cst_19 = arith.constant dense<0.000000e+00> : vector<64x128xf32>
    %15 = tpu.matmul %12, %14, %cst_19 {dimension_numbers = #tpu.dot_dimension_numbers<[1], [0], [0], [1], [0, 0, 1, 1], [], []>} : vector<64x64xbf16>, vector<64x128xbf16>, vector<64x128xf32> -> vector<64x128xf32>
    %16 = arith.addf %10, %15 : vector<64x128xf32>
    %c0_20 = arith.constant 0 : index
    %c1_21 = arith.constant 1 : index
    %c0_22 = arith.constant 0 : index
    %c0_23 = arith.constant 0 : index
    %17 = vector.load %arg2[%c0_20, %c1_21, %c0_22, %c0_23] : memref<1x10x10x64xbf16, #tpu.memory_space<vmem>>, vector<1x8x8x64xbf16>
    %18 = vector.shape_cast %17 : vector<1x8x8x64xbf16> to vector<64x64xbf16>
    %c3 = arith.constant 3 : index
    %c0_24 = arith.constant 0 : index
    %c0_25 = arith.constant 0 : index
    %19 = vector.load %arg3[%c3, %c0_24, %c0_25] : memref<9x64x128xbf16, #tpu.memory_space<vmem>>, vector<1x64x128xbf16>
    %20 = vector.shape_cast %19 : vector<1x64x128xbf16> to vector<64x128xbf16>
    %cst_26 = arith.constant dense<0.000000e+00> : vector<64x128xf32>
    %21 = tpu.matmul %18, %20, %cst_26 {dimension_numbers = #tpu.dot_dimension_numbers<[1], [0], [0], [1], [0, 0, 1, 1], [], []>} : vector<64x64xbf16>, vector<64x128xbf16>, vector<64x128xf32> -> vector<64x128xf32>
    %22 = arith.addf %16, %21 : vector<64x128xf32>
    %c0_27 = arith.constant 0 : index
    %c1_28 = arith.constant 1 : index
    %c1_29 = arith.constant 1 : index
    %c0_30 = arith.constant 0 : index
    %23 = vector.load %arg2[%c0_27, %c1_28, %c1_29, %c0_30] : memref<1x10x10x64xbf16, #tpu.memory_space<vmem>>, vector<1x8x8x64xbf16>
    %24 = vector.shape_cast %23 : vector<1x8x8x64xbf16> to vector<64x64xbf16>
    %c4 = arith.constant 4 : index
    %c0_31 = arith.constant 0 : index
    %c0_32 = arith.constant 0 : index
    %25 = vector.load %arg3[%c4, %c0_31, %c0_32] : memref<9x64x128xbf16, #tpu.memory_space<vmem>>, vector<1x64x128xbf16>
    %26 = vector.shape_cast %25 : vector<1x64x128xbf16> to vector<64x128xbf16>
    %cst_33 = arith.constant dense<0.000000e+00> : vector<64x128xf32>
    %27 = tpu.matmul %24, %26, %cst_33 {dimension_numbers = #tpu.dot_dimension_numbers<[1], [0], [0], [1], [0, 0, 1, 1], [], []>} : vector<64x64xbf16>, vector<64x128xbf16>, vector<64x128xf32> -> vector<64x128xf32>
    %28 = arith.addf %22, %27 : vector<64x128xf32>
    %c0_34 = arith.constant 0 : index
    %c1_35 = arith.constant 1 : index
    %c2_36 = arith.constant 2 : index
    %c0_37 = arith.constant 0 : index
    %29 = vector.load %arg2[%c0_34, %c1_35, %c2_36, %c0_37] : memref<1x10x10x64xbf16, #tpu.memory_space<vmem>>, vector<1x8x8x64xbf16>
    %30 = vector.shape_cast %29 : vector<1x8x8x64xbf16> to vector<64x64xbf16>
    %c5 = arith.constant 5 : index
    %c0_38 = arith.constant 0 : index
    %c0_39 = arith.constant 0 : index
    %31 = vector.load %arg3[%c5, %c0_38, %c0_39] : memref<9x64x128xbf16, #tpu.memory_space<vmem>>, vector<1x64x128xbf16>
    %32 = vector.shape_cast %31 : vector<1x64x128xbf16> to vector<64x128xbf16>
    %cst_40 = arith.constant dense<0.000000e+00> : vector<64x128xf32>
    %33 = tpu.matmul %30, %32, %cst_40 {dimension_numbers = #tpu.dot_dimension_numbers<[1], [0], [0], [1], [0, 0, 1, 1], [], []>} : vector<64x64xbf16>, vector<64x128xbf16>, vector<64x128xf32> -> vector<64x128xf32>
    %34 = arith.addf %28, %33 : vector<64x128xf32>
    %c0_41 = arith.constant 0 : index
    %c2_42 = arith.constant 2 : index
    %c0_43 = arith.constant 0 : index
    %c0_44 = arith.constant 0 : index
    %35 = vector.load %arg2[%c0_41, %c2_42, %c0_43, %c0_44] : memref<1x10x10x64xbf16, #tpu.memory_space<vmem>>, vector<1x8x8x64xbf16>
    %36 = vector.shape_cast %35 : vector<1x8x8x64xbf16> to vector<64x64xbf16>
    %c6 = arith.constant 6 : index
    %c0_45 = arith.constant 0 : index
    %c0_46 = arith.constant 0 : index
    %37 = vector.load %arg3[%c6, %c0_45, %c0_46] : memref<9x64x128xbf16, #tpu.memory_space<vmem>>, vector<1x64x128xbf16>
    %38 = vector.shape_cast %37 : vector<1x64x128xbf16> to vector<64x128xbf16>
    %cst_47 = arith.constant dense<0.000000e+00> : vector<64x128xf32>
    %39 = tpu.matmul %36, %38, %cst_47 {dimension_numbers = #tpu.dot_dimension_numbers<[1], [0], [0], [1], [0, 0, 1, 1], [], []>} : vector<64x64xbf16>, vector<64x128xbf16>, vector<64x128xf32> -> vector<64x128xf32>
    %40 = arith.addf %34, %39 : vector<64x128xf32>
    %c0_48 = arith.constant 0 : index
    %c2_49 = arith.constant 2 : index
    %c1_50 = arith.constant 1 : index
    %c0_51 = arith.constant 0 : index
    %41 = vector.load %arg2[%c0_48, %c2_49, %c1_50, %c0_51] : memref<1x10x10x64xbf16, #tpu.memory_space<vmem>>, vector<1x8x8x64xbf16>
    %42 = vector.shape_cast %41 : vector<1x8x8x64xbf16> to vector<64x64xbf16>
    %c7 = arith.constant 7 : index
    %c0_52 = arith.constant 0 : index
    %c0_53 = arith.constant 0 : index
    %43 = vector.load %arg3[%c7, %c0_52, %c0_53] : memref<9x64x128xbf16, #tpu.memory_space<vmem>>, vector<1x64x128xbf16>
    %44 = vector.shape_cast %43 : vector<1x64x128xbf16> to vector<64x128xbf16>
    %cst_54 = arith.constant dense<0.000000e+00> : vector<64x128xf32>
    %45 = tpu.matmul %42, %44, %cst_54 {dimension_numbers = #tpu.dot_dimension_numbers<[1], [0], [0], [1], [0, 0, 1, 1], [], []>} : vector<64x64xbf16>, vector<64x128xbf16>, vector<64x128xf32> -> vector<64x128xf32>
    %46 = arith.addf %40, %45 : vector<64x128xf32>
    %c0_55 = arith.constant 0 : index
    %c2_56 = arith.constant 2 : index
    %c2_57 = arith.constant 2 : index
    %c0_58 = arith.constant 0 : index
    %47 = vector.load %arg2[%c0_55, %c2_56, %c2_57, %c0_58] : memref<1x10x10x64xbf16, #tpu.memory_space<vmem>>, vector<1x8x8x64xbf16>
    %48 = vector.shape_cast %47 : vector<1x8x8x64xbf16> to vector<64x64xbf16>
    %c8 = arith.constant 8 : index
    %c0_59 = arith.constant 0 : index
    %c0_60 = arith.constant 0 : index
    %49 = vector.load %arg3[%c8, %c0_59, %c0_60] : memref<9x64x128xbf16, #tpu.memory_space<vmem>>, vector<1x64x128xbf16>
    %50 = vector.shape_cast %49 : vector<1x64x128xbf16> to vector<64x128xbf16>
    %cst_61 = arith.constant dense<0.000000e+00> : vector<64x128xf32>
    %51 = tpu.matmul %48, %50, %cst_61 {dimension_numbers = #tpu.dot_dimension_numbers<[1], [0], [0], [1], [0, 0, 1, 1], [], []>} : vector<64x64xbf16>, vector<64x128xbf16>, vector<64x128xf32> -> vector<64x128xf32>
    %52 = arith.addf %46, %51 : vector<64x128xf32>
    %c0_62 = arith.constant 0 : index
    %c0_63 = arith.constant 0 : index
    %53 = vector.load %arg4[%c0_62, %c0_63] : memref<1x128xf32, #tpu.memory_space<vmem>>, vector<1x128xf32>
    %54 = vector.broadcast %53 : vector<1x128xf32> to vector<64x128xf32>
    %55 = arith.mulf %52, %54 : vector<64x128xf32>
    %c0_64 = arith.constant 0 : index
    %c0_65 = arith.constant 0 : index
    %56 = vector.load %arg5[%c0_64, %c0_65] : memref<1x128xf32, #tpu.memory_space<vmem>>, vector<1x128xf32>
    %57 = vector.broadcast %56 : vector<1x128xf32> to vector<64x128xf32>
    %58 = arith.addf %55, %57 : vector<64x128xf32>
    %cst_66 = arith.constant 0.000000e+00 : f32
    %59 = vector.broadcast %cst_66 : f32 to vector<64x128xf32>
    %60 = arith.maximumf %58, %59 : vector<64x128xf32>
    %61 = vector.shape_cast %60 : vector<64x128xf32> to vector<1x8x8x128xf32>
    %62 = arith.truncf %61 : vector<1x8x8x128xf32> to vector<1x8x8x128xbf16>
    %c0_67 = arith.constant 0 : index
    %c0_68 = arith.constant 0 : index
    %c0_69 = arith.constant 0 : index
    %c0_70 = arith.constant 0 : index
    %63 = vector.load %arg6[%c0_67, %c0_68, %c0_69, %c0_70] : memref<1x8x8x128xbf16, #tpu.memory_space<vmem>>, vector<1x8x8x128xbf16>
    tpu.vector_store %arg6[%c0_67, %c0_68, %c0_69, %c0_70], %62 {strides = array<i32>} : memref<1x8x8x128xbf16, #tpu.memory_space<vmem>>, vector<1x8x8x128xbf16>,
    return
  }
  func.func @transform_0(%arg0: i32, %arg1: i32) -> (i32, i32, i32, i32) {
    %c0_i32 = arith.constant 0 : i32
    %c0_i32_0 = arith.constant 0 : i32
    %c0_i32_1 = arith.constant 0 : i32
    %c0_i32_2 = arith.constant 0 : i32
    return %arg1, %c0_i32, %c0_i32_0, %c0_i32_1 : i32, i32, i32, i32
  }
  func.func @transform_1(%arg0: i32, %arg1: i32) -> (i32, i32, i32) {
    %c0_i32 = arith.constant 0 : i32
    %c0_i32_0 = arith.constant 0 : i32
    %c0_i32_1 = arith.constant 0 : i32
    return %c0_i32, %c0_i32_0, %arg0 : i32, i32, i32
  }
  func.func @transform_2(%arg0: i32, %arg1: i32) -> (i32, i32) {
    %c0_i32 = arith.constant 0 : i32
    %c0_i32_0 = arith.constant 0 : i32
    return %c0_i32, %arg0 : i32, i32
  }
  func.func @transform_3(%arg0: i32, %arg1: i32) -> (i32, i32) {
    %c0_i32 = arith.constant 0 : i32
    %c0_i32_0 = arith.constant 0 : i32
    return %c0_i32, %arg0 : i32, i32
  }
  func.func @transform_4(%arg0: i32, %arg1: i32) -> (i32, i32, i32, i32) {
    %c0_i32 = arith.constant 0 : i32
    %c0_i32_0 = arith.constant 0 : i32
    %c0_i32_1 = arith.constant 0 : i32
    return %arg1, %c0_i32, %c0_i32_0, %arg0 : i32, i32, i32, i32
  }
}

</mosaic_0001>

<llo_original>
// kernel: tpu_custom_call.1
$region0: #{tpu_custom_call.1}
  #allocation0 [shape = 'u32[]', space=smem, size = 0x4, offset = 0x4, fixed_abs, tag = 'smem constant byte address 0x4 - core index']
  #allocation1 [shape = 'u32[72,128]{1,0:T(1,128)}', space=vmem, size = 0x9000, scoped, tag = 'internal scratch']
  %s0 = inlined_call_operand.vmem [shape: bf16[2,10,10,64], index: 0, kind: input, shape index: {}]
  %s1 = inlined_call_operand.hbm [shape: bf16[9,64,128], index: 1, kind: input, shape index: {}]
  %s2 = inlined_call_operand.vmem [shape: f32[1,128], index: 2, kind: input, shape index: {}]
  %s3 = inlined_call_operand.vmem [shape: f32[1,128], index: 3, kind: input, shape index: {}]
  %s4 = inlined_call_operand.hbm [shape: bf16[2,8,8,128], index: 4, kind: output, shape index: {}]
  %s5 = sld [smem:[#allocation0]]
  $region53: #{tpu_custom_call.1} parent=0
    _
  %s7 = ssub.s32 1, %s5
  %s8 = scalar_select 0, %s7, %s5
  $region1: #{tpu_custom_call.1} parent=0
    #allocation2 [shape = 'u8[147456]{0}', space=vmem, size = 0x24000, scoped, tag = 'input window, operand 1, single buffered']
    #allocation3 [shape = 's32[2]{0}', space=sflag, size = 0x8, scoped, tag = 'scoped memory for tpu_custom_call.1']
    #allocation4 [shape = 's32[2]{0}', space=sflag, size = 0x8, scoped, tag = 'scoped memory for tpu_custom_call.1']
    #allocation5 [shape = 'u8[32768]{0}', space=vmem, size = 0x8000, scoped, tag = 'output window, operand 0']
    %9 = vsyncpa [#allocation3], 0
    %10 = vsyncpa [#allocation4], 0
    %s11 = scalar_lea.sflag [#allocation4], 1
    %12 = vsyncpa %s11, 0
    loop: start=0, step=1, limit=4
    $region2: #{tpu_custom_call.1} parent=1 // loop_pre_header
      _
    $region3: #{tpu_custom_call.1} parent=1 // loop_header
      %s14 = sphi 0, %s18
      %p15 = scmp.ge.s32.totalorder %s14, 4
      %s21 = sphi 0, %s33
      %s22 = sphi 0, %s29
      %s23 = sphi 0, %s21
      %s24 = sphi 0, %s22
      %s25 = sphi 0, %s23
      %s26 = sphi 0, %s24
      %s36 = sphi 0, %s38
      %s39 = sphi 0, %s36
      %s40 = sphi 0, %s39
      %s56 = sphi 0, %s40
      %s62 = sphi 0, %s64
      %s65 = sphi 0, %s62
      %s66 = sphi 0, %s65
      %s82 = sphi 0, %s66
      %s88 = sphi 0, %s90
      %s91 = sphi 0, %s88
      %s92 = sphi 0, %s91
      %s108 = sphi 0, %s92
      %s114 = sphi 0, %s116
      %s117 = sphi 0, %s114
      %s118 = sphi 0, %s117
      %s134 = sphi 0, %s118
      %s142 = sphi 0, %s144
      %s145 = sphi 0, %s142
      %s146 = sphi 0, %s145
      %s162 = sphi 0, %s146
    $region4: #{tpu_custom_call.1} parent=1 // loop_header_branch
      %17 = sbr.rel (%p15) target = $region8
    $region5: #{tpu_custom_call.1} parent=1 // loop_body
      %s19 = ssub.s32 %s14, 1
      %s20 = ssub.s32 %s14, 2
      %s27 = sadd.s32 1, %s22
      %p28 = scmp.ge.s32.totalorder %s27, 2
      %s29 = scalar_select %p28, 0, %s27
      %s30 = sadd.s32 1, %s21
      %s31 = scalar_select %p28, %s30, %s21
      %p32 = scmp.ge.s32.totalorder %s31, 1
      %s33 = scalar_select %p32, 0, %s31
      %s34 = ssub.s32 %s22, %s29
      %p35 = scmp.eq.s32.totalorder %s34, 0
      %s37 = sadd.s32 %s36, 1
      %s38 = scalar_select %p35, %s36, %s37
      %p41 = pneg %p35
      %p42 = scmp.eq.s32.totalorder %s14, 1
      %p43 = por %p41, %p42
      %p44 = scmp.ne.s32.totalorder %s36, %s39
      %p45 = scmp.eq.s32.totalorder %s14, 0
      %p46 = por %p44, %p45
      %p47 = scmp.ne.s32.totalorder %s36, %s39
      %p48 = scmp.eq.s32.totalorder %s19, 1
      %p49 = por %p47, %p48
      %p50 = scmp.ne.s32.totalorder %s39, %s40
      %p51 = scmp.eq.s32.totalorder %s19, 0
      %p52 = por %p50, %p51
      %p53 = scmp.ne.s32.totalorder %s39, %s40
      %p54 = scmp.eq.s32.totalorder %s20, 1
      %p55 = por %p53, %p54
      %p57 = scmp.ne.s32.totalorder %s40, %s56
      %p58 = scmp.eq.s32.totalorder %s20, 0
      %p59 = por %p57, %p58
      %s60 = ssub.s32 %s21, %s33
      %p61 = scmp.eq.s32.totalorder %s60, 0
      %s63 = sadd.s32 %s62, 1
      %s64 = scalar_select %p61, %s62, %s63
      %p67 = pneg %p61
      %p68 = scmp.eq.s32.totalorder %s14, 1
      %p69 = por %p67, %p68
      %p70 = scmp.ne.s32.totalorder %s62, %s65
      %p71 = scmp.eq.s32.totalorder %s14, 0
      %p72 = por %p70, %p71
      %p73 = scmp.ne.s32.totalorder %s62, %s65
      %p74 = scmp.eq.s32.totalorder %s19, 1
      %p75 = por %p73, %p74
      %p76 = scmp.ne.s32.totalorder %s65, %s66
      %p77 = scmp.eq.s32.totalorder %s19, 0
      %p78 = por %p76, %p77
      %p79 = scmp.ne.s32.totalorder %s65, %s66
      %p80 = scmp.eq.s32.totalorder %s20, 1
      %p81 = por %p79, %p80
      %p83 = scmp.ne.s32.totalorder %s66, %s82
      %p84 = scmp.eq.s32.totalorder %s20, 0
      %p85 = por %p83, %p84
      %s86 = ssub.s32 %s21, %s33
      %p87 = scmp.eq.s32.totalorder %s86, 0
      %s89 = sadd.s32 %s88, 1
      %s90 = scalar_select %p87, %s88, %s89
      %p93 = pneg %p87
      %p94 = scmp.eq.s32.totalorder %s14, 1
      %p95 = por %p93, %p94
      %p96 = scmp.ne.s32.totalorder %s88, %s91
      %p97 = scmp.eq.s32.totalorder %s14, 0
      %p98 = por %p96, %p97
      %p99 = scmp.ne.s32.totalorder %s88, %s91
      %p100 = scmp.eq.s32.totalorder %s19, 1
      %p101 = por %p99, %p100
      %p102 = scmp.ne.s32.totalorder %s91, %s92
      %p103 = scmp.eq.s32.totalorder %s19, 0
      %p104 = por %p102, %p103
      %p105 = scmp.ne.s32.totalorder %s91, %s92
      %p106 = scmp.eq.s32.totalorder %s20, 1
      %p107 = por %p105, %p106
      %p109 = scmp.ne.s32.totalorder %s92, %s108
      %p110 = scmp.eq.s32.totalorder %s20, 0
      %p111 = por %p109, %p110
      %s112 = ssub.s32 %s21, %s33
      %p113 = scmp.eq.s32.totalorder %s112, 0
      %s115 = sadd.s32 %s114, 1
      %s116 = scalar_select %p113, %s114, %s115
      %p119 = pneg %p113
      %p120 = scmp.eq.s32.totalorder %s14, 1
      %p121 = por %p119, %p120
      %p122 = scmp.ne.s32.totalorder %s114, %s117
      %p123 = scmp.eq.s32.totalorder %s14, 0
      %p124 = por %p122, %p123
      %p125 = scmp.ne.s32.totalorder %s114, %s117
      %p126 = scmp.eq.s32.totalorder %s19, 1
      %p127 = por %p125, %p126
      %p128 = scmp.ne.s32.totalorder %s117, %s118
      %p129 = scmp.eq.s32.totalorder %s19, 0
      %p130 = por %p128, %p129
      %p131 = scmp.ne.s32.totalorder %s117, %s118
      %p132 = scmp.eq.s32.totalorder %s20, 1
      %p133 = por %p131, %p132
      %p135 = scmp.ne.s32.totalorder %s118, %s134
      %p136 = scmp.eq.s32.totalorder %s20, 0
      %p137 = por %p135, %p136
      %s138 = ssub.s32 %s22, %s29
      %s139 = ssub.s32 %s21, %s33
      %s140 = sor.u32 %s138, %s139
      %p141 = scmp.eq.s32.totalorder %s140, 0
      %s143 = sadd.s32 %s142, 1
      %s144 = scalar_select %p141, %s142, %s143
      %p147 = pneg %p141
      %p148 = scmp.eq.s32.totalorder %s14, 1
      %p149 = por %p147, %p148
      %p150 = scmp.ne.s32.totalorder %s142, %s145
      %p151 = scmp.eq.s32.totalorder %s14, 0
      %p152 = por %p150, %p151
      %p153 = scmp.ne.s32.totalorder %s142, %s145
      %p154 = scmp.eq.s32.totalorder %s19, 1
      %p155 = por %p153, %p154
      %p156 = scmp.ne.s32.totalorder %s145, %s146
      %p157 = scmp.eq.s32.totalorder %s19, 0
      %p158 = por %p156, %p157
      %p159 = scmp.ne.s32.totalorder %s145, %s146
      %p160 = scmp.eq.s32.totalorder %s20, 1
      %p161 = por %p159, %p160
      %p163 = scmp.ne.s32.totalorder %s146, %s162
      %p164 = scmp.eq.s32.totalorder %s20, 0
      %p165 = por %p163, %p164
      %p166 = scmp.le.s32.totalorder 1, %s14
      %p167 = scmp.lt.s32.totalorder %s14, 3
      %p168 = pnand %p166, %p167
      %p169 = pneg %p168
      // Predicated region
      $region9: #{tpu_custom_call.1} parent=5 // pred_check
        _
      $region10: #{tpu_custom_call.1} parent=5 // pred_check_branch
        %171 = sbr.rel (%p168) target = $region12
      $region11: #{tpu_custom_call.1} parent=5 // pred_region
        %s172 = ssub.s32 %s14, 1
        // Predicated region
        $region13: #{tpu_custom_call.1} parent=11 // pred_check
          %p173 = pneg %p78
        $region14: #{tpu_custom_call.1} parent=11 // pred_check_branch
          %175 = sbr.rel (%p173) target = $region16
        $region15: #{tpu_custom_call.1} parent=11 // pred_region
          %177 = vsyncadd [#allocation3], 0
          %s178 = smul.addr %s23, 4
          %s179 = scalar_lea.hbm %s1, %s178
          %s180 = sshll.u32 %s179, 4
          %s181 = int_to_ptr.hbm [resolvable:$true] %s180
          %s182 = sshll.u32 [#allocation2], 4
          %s183 = int_to_ptr.vmem [resolvable:$true] %s182
          %188 = dma.hbm_to_vmem [thread:$0]  %s181, 4608, %s183, [#allocation3], 64, 64, 4
        $region16: #{tpu_custom_call.1} parent=11 // pred_fallthru
          _
        // Predicated region
        $region17: #{tpu_custom_call.1} parent=11 // pred_check
          %p189 = pneg %p104
        $region18: #{tpu_custom_call.1} parent=11 // pred_check_branch
          %191 = sbr.rel (%p189) target = $region20
        $region19: #{tpu_custom_call.1} parent=11 // pred_region
          %p192 = scmp.lt.s32.totalorder %s23, 0
          %s193 = scalar_select %p192, %s23, 0
          %s194 = scalar_lea.vmem %s2, %s193
        $region20: #{tpu_custom_call.1} parent=11 // pred_fallthru
          _
        // Predicated region
        $region21: #{tpu_custom_call.1} parent=11 // pred_check
          %p195 = pneg %p130
        $region22: #{tpu_custom_call.1} parent=11 // pred_check_branch
          %197 = sbr.rel (%p195) target = $region24
        $region23: #{tpu_custom_call.1} parent=11 // pred_region
          %p198 = scmp.lt.s32.totalorder %s23, 0
          %s199 = scalar_select %p198, %s23, 0
          %s200 = scalar_lea.vmem %s3, %s199
        $region24: #{tpu_custom_call.1} parent=11 // pred_fallthru
          _
      $region12: #{tpu_custom_call.1} parent=5 // pred_fallthru
        _
      %p201 = scmp.lt.s32.totalorder %s14, 2
      // Predicated region
      $region25: #{tpu_custom_call.1} parent=5 // pred_check
        %p202 = pneg %p201
      $region26: #{tpu_custom_call.1} parent=5 // pred_check_branch
        %204 = sbr.rel (%p202) target = $region28
      $region27: #{tpu_custom_call.1} parent=5 // pred_region
        // Predicated region
        $region29: #{tpu_custom_call.1} parent=27 // pred_check
          %p205 = pneg %p46
        $region30: #{tpu_custom_call.1} parent=27 // pred_check_branch
          %207 = sbr.rel (%p205) target = $region32
        $region31: #{tpu_custom_call.1} parent=27 // pred_region
          %p208 = scmp.lt.s32.totalorder %s22, 1
          %s209 = scalar_select %p208, %s22, 1
          %s210 = smul.addr %s209, 20
          %s211 = smul.addr %s210, 4
          %s212 = scalar_lea.vmem %s0, %s211
        $region32: #{tpu_custom_call.1} parent=27 // pred_fallthru
          _
      $region28: #{tpu_custom_call.1} parent=5 // pred_fallthru
        _
      %p213 = scmp.le.s32.totalorder 1, %s14
      %p214 = scmp.lt.s32.totalorder %s14, 3
      %p215 = pnand %p213, %p214
      %p216 = pneg %p215
      // Predicated region
      $region33: #{tpu_custom_call.1} parent=5 // pred_check
        _
      $region34: #{tpu_custom_call.1} parent=5 // pred_check_branch
        %218 = sbr.rel (%p215) target = $region36
      $region35: #{tpu_custom_call.1} parent=5 // pred_region
        %s219 = ssub.s32 %s14, 1
        // Predicated region
        $region37: #{tpu_custom_call.1} parent=35 // pred_check
          %p220 = pneg %p78
        $region38: #{tpu_custom_call.1} parent=35 // pred_check_branch
          %222 = sbr.rel (%p220) target = $region40
        $region39: #{tpu_custom_call.1} parent=35 // pred_region
          %224 = dma.done [#allocation3], 4608
        $region40: #{tpu_custom_call.1} parent=35 // pred_fallthru
          _
        %p225 = scmp.lt.s32.totalorder %s24, 1
        %s226 = scalar_select %p225, %s24, 1
        %s227 = smul.addr %s226, 20
        %s228 = smul.addr %s227, 4
        %s229 = scalar_lea.vmem %s0, %s228
        %p230 = pneg %p52
        %p231 = pneg %p49
        %p232 = pneg %p78
        %p233 = pneg %p75
        %p234 = scmp.lt.s32.totalorder %s23, 0
        %s235 = scalar_select %p234, %s23, 0
        %s236 = scalar_lea.vmem %s2, %s235
        %p237 = pneg %p104
        %p238 = pneg %p101
        %p239 = scmp.lt.s32.totalorder %s23, 0
        %s240 = scalar_select %p239, %s23, 0
        %s241 = scalar_lea.vmem %s3, %s240
        %p242 = pneg %p130
        %p243 = pneg %p127
        %p244 = pneg %p158
        %p245 = pneg %p155
        %s246 = sand.u32 %s145, 1
        %s247 = scalar_lea.sflag [#allocation4], %s246
        %s248 = sand.u32 %s145, 1
        %s249 = smul.addr %s248, 32
        %s250 = scalar_lea.vmem [#allocation5], %s249
        %p251 = scmp.lt.s32.totalorder %s24, 1
        %s252 = scalar_select %p251, %s24, 1
        %s253 = smul.addr %s252, 20
        %s254 = smul.addr %s253, 4
        %s255 = scalar_lea.vmem %s0, %s254
        %p256 = scmp.lt.s32.totalorder %s23, 0
        %s257 = scalar_select %p256, %s23, 0
        %s258 = scalar_lea.vmem %s2, %s257
        %p259 = scmp.lt.s32.totalorder %s23, 0
        %s260 = scalar_select %p259, %s23, 0
        %s261 = scalar_lea.vmem %s3, %s260
        %v263 = vld [vmem:[%s255] sm:$0xf]
        %v264 = vld [vmem:[%s255 + $0x8] sm:$0xf]
        %v265 = vld [vmem:[%s255 + $0x10] sm:$0xf]
        %v266 = vld [vmem:[%s255 + $0x18] sm:$0xf]
        %v267 = vld [vmem:[%s255 + $0x20] sm:$0xf]
        %v268 = vld [vmem:[%s255 + $0x28] sm:$0xf]
        %v269 = vld [vmem:[%s255 + $0x30] sm:$0xf]
        %v270 = vld [vmem:[%s255 + $0x38] sm:$0xf]
        %v271 = vld [vmem:[#allocation2] sm:$0xf]
        %v272 = vld [vmem:[#allocation2 + $0x4] sm:$0xf]
        %v273 = vld [vmem:[#allocation2 + $0x8] sm:$0xf]
        %v274 = vld [vmem:[#allocation2 + $0xc] sm:$0xf]
        %v275 = vld [vmem:[#allocation2 + $0x10] sm:$0xf]
        %v276 = vld [vmem:[#allocation2 + $0x14] sm:$0xf]
        %v277 = vld [vmem:[#allocation2 + $0x18] sm:$0xf]
        %v278 = vld [vmem:[#allocation2 + $0x1c] sm:$0xf]
        %v279 = vld [vmem:[%s255 + $0x4] sm:$0x1]
        %v280 = vld [vmem:[%s255 + $0xc] sm:$0x1]
        %v281 = vld [vmem:[%s255 + $0x14] sm:$0x1]
        %v282 = vld [vmem:[%s255 + $0x1c] sm:$0x1]
        %v283 = vld [vmem:[%s255 + $0x24] sm:$0x1]
        %v284 = vld [vmem:[%s255 + $0x2c] sm:$0x1]
        %v285 = vld [vmem:[%s255 + $0x34] sm:$0x1]
        %v286 = vld [vmem:[%s255 + $0x3c] sm:$0x1]
        %vm287 = vsmask.f32 3328
        %vm288 = vsmask.f32 7440
        %vm289 = vmor %vm287, %vm288
        %v291 = vshrl.u32 %v263, 16
        %v293 = vrot.slane %v291, 4
        %v294 = vshll.u32 %v263, 16
        %v296 = vrot.slane %v294, 5
        %v297 = vor.u32 %v293, %v296
        %v298 = vrot.slane %v297, 4
        %v300 = vshll.u32 %v279, 16
        %v302 = vrot.slane %v300, 5
        %v303 = vsel %vm289, %v298, %v302
        %v305 = vshrl.u32 %v264, 16
        %v307 = vrot.slane %v305, 4
        %v308 = vshll.u32 %v264, 16
        %v310 = vrot.slane %v308, 5
        %v311 = vor.u32 %v307, %v310
        %v312 = vrot.slane %v311, 4
        %v314 = vshll.u32 %v280, 16
        %v316 = vrot.slane %v314, 5
        %v317 = vsel %vm289, %v312, %v316
        %v319 = vshrl.u32 %v265, 16
        %v321 = vrot.slane %v319, 4
        %v322 = vshll.u32 %v265, 16
        %v324 = vrot.slane %v322, 5
        %v325 = vor.u32 %v321, %v324
        %v326 = vrot.slane %v325, 4
        %v328 = vshll.u32 %v281, 16
        %v330 = vrot.slane %v328, 5
        %v331 = vsel %vm289, %v326, %v330
        %v333 = vshrl.u32 %v266, 16
        %v335 = vrot.slane %v333, 4
        %v336 = vshll.u32 %v266, 16
        %v338 = vrot.slane %v336, 5
        %v339 = vor.u32 %v335, %v338
        %v340 = vrot.slane %v339, 4
        %v342 = vshll.u32 %v282, 16
        %v344 = vrot.slane %v342, 5
        %v345 = vsel %vm289, %v340, %v344
        %v347 = vshrl.u32 %v267, 16
        %v349 = vrot.slane %v347, 4
        %v350 = vshll.u32 %v267, 16
        %v352 = vrot.slane %v350, 5
        %v353 = vor.u32 %v349, %v352
        %v354 = vrot.slane %v353, 4
        %v356 = vshll.u32 %v283, 16
        %v358 = vrot.slane %v356, 5
        %v359 = vsel %vm289, %v354, %v358
        %v361 = vshrl.u32 %v268, 16
        %v363 = vrot.slane %v361, 4
        %v364 = vshll.u32 %v268, 16
        %v366 = vrot.slane %v364, 5
        %v367 = vor.u32 %v363, %v366
        %v368 = vrot.slane %v367, 4
        %v370 = vshll.u32 %v284, 16
        %v372 = vrot.slane %v370, 5
        %v373 = vsel %vm289, %v368, %v372
        %v375 = vshrl.u32 %v269, 16
        %v377 = vrot.slane %v375, 4
        %v378 = vshll.u32 %v269, 16
        %v380 = vrot.slane %v378, 5
        %v381 = vor.u32 %v377, %v380
        %v382 = vrot.slane %v381, 4
        %v384 = vshll.u32 %v285, 16
        %v386 = vrot.slane %v384, 5
        %v387 = vsel %vm289, %v382, %v386
        %v389 = vshrl.u32 %v270, 16
        %v391 = vrot.slane %v389, 4
        %v392 = vshll.u32 %v270, 16
        %v394 = vrot.slane %v392, 5
        %v395 = vor.u32 %v391, %v394
        %v396 = vrot.slane %v395, 4
        %v398 = vshll.u32 %v286, 16
        %v400 = vrot.slane %v398, 5
        %v401 = vsel %vm289, %v396, %v400
        %s402 = scalar_lea.vmem [#allocation2], 32
        %v403 = vld [vmem:[%s402] sm:$0xf]
        %v404 = vld [vmem:[%s402 + $0x4] sm:$0xf]
        %v405 = vld [vmem:[%s402 + $0x8] sm:$0xf]
        %v406 = vld [vmem:[%s402 + $0xc] sm:$0xf]
        %v407 = vld [vmem:[%s402 + $0x10] sm:$0xf]
        %v408 = vld [vmem:[%s402 + $0x14] sm:$0xf]
        %v409 = vld [vmem:[%s402 + $0x18] sm:$0xf]
        %v410 = vld [vmem:[%s402 + $0x1c] sm:$0xf]
        %v411 = vunpack.c.l.b16 %v303
        %v412 = vunpack.c.l.b16 %v317
        %v413 = vunpack.c.l.b16 %v331
        %v414 = vunpack.c.l.b16 %v345
        %v415 = vunpack.c.l.b16 %v359
        %v416 = vunpack.c.l.b16 %v373
        %v417 = vunpack.c.l.b16 %v387
        %v418 = vunpack.c.l.b16 %v401
        %v419 = vpack.c.b16 %v412, %v411
        %v420 = vpack.c.b16 %v414, %v413
        %v421 = vpack.c.b16 %v416, %v415
        %v422 = vpack.c.b16 %v418, %v417
        %v431 = vunpack.c.l.b16 %v403
        %v432 = vunpack.c.l.b16 %v404
        %v433 = vunpack.c.l.b16 %v405
        %v434 = vunpack.c.l.b16 %v406
        %v435 = vunpack.c.l.b16 %v407
        %v436 = vunpack.c.l.b16 %v408
        %v437 = vunpack.c.l.b16 %v409
        %v438 = vunpack.c.l.b16 %v410
        %v439 = vpack.c.b16 %v432, %v431
        %v440 = vpack.c.b16 %v434, %v433
        %v441 = vpack.c.b16 %v436, %v435
        %v442 = vpack.c.b16 %v438, %v437
        %vm447 = vcmask 523264
        %v449 = vsel %vm447, %v419, 0
        %v452 = vsel %vm447, %v420, 0
        %v455 = vsel %vm447, %v421, 0
        %v458 = vsel %vm447, %v422, 0
        %460 = vmatpush.bf16.msra.mxu0 0
        %461 = vmatpush.bf16.msra.mxu0 0
        %462 = vmatpush.bf16.msra.mxu0 0
        %463 = vmatpush.bf16.msra.mxu0 0
        %464 = vmatpush.bf16.msra.mxu0 %v442
        %465 = vmatpush.bf16.msra.mxu0 %v441
        %466 = vmatpush.bf16.msra.mxu0 %v440
        %467 = vmatpush.bf16.msra.mxu0 %v439
        %468 = vmatmul.bf16.gmra.mxu0 %v449
        %v469 = vpop.f32.mrf.mxu0
        %v470 = vadd.f32 0.0, %v469
        %v471 = vpop.f32.mrf.mxu0
        %v472 = vadd.f32 0.0, %v471
        %473 = vmatmul.bf16.gmra.mxu0 %v452
        %v474 = vpop.f32.mrf.mxu0
        %v475 = vadd.f32 0.0, %v474
        %v476 = vpop.f32.mrf.mxu0
        %v477 = vadd.f32 0.0, %v476
        %478 = vmatmul.bf16.gmra.mxu0 %v455
        %v479 = vpop.f32.mrf.mxu0
        %v480 = vadd.f32 0.0, %v479
        %v481 = vpop.f32.mrf.mxu0
        %v482 = vadd.f32 0.0, %v481
        %483 = vmatmul.bf16.gmra.mxu0 %v458
        %v484 = vpop.f32.mrf.mxu0
        %v485 = vadd.f32 0.0, %v484
        %v486 = vpop.f32.mrf.mxu0
        %v487 = vadd.f32 0.0, %v486
        %488 = vdwg.mxu0
        %v497 = vunpack.c.l.b16 %v263
        %v498 = vunpack.c.l.b16 %v264
        %v499 = vunpack.c.l.b16 %v265
        %v500 = vunpack.c.l.b16 %v266
        %v501 = vunpack.c.l.b16 %v267
        %v502 = vunpack.c.l.b16 %v268
        %v503 = vunpack.c.l.b16 %v269
        %v504 = vunpack.c.l.b16 %v270
        %v505 = vpack.c.b16 %v498, %v497
        %v506 = vpack.c.b16 %v500, %v499
        %v507 = vpack.c.b16 %v502, %v501
        %v508 = vpack.c.b16 %v504, %v503
        %v517 = vunpack.c.l.b16 %v271
        %v518 = vunpack.c.l.b16 %v272
        %v519 = vunpack.c.l.b16 %v273
        %v520 = vunpack.c.l.b16 %v274
        %v521 = vunpack.c.l.b16 %v275
        %v522 = vunpack.c.l.b16 %v276
        %v523 = vunpack.c.l.b16 %v277
        %v524 = vunpack.c.l.b16 %v278
        %v525 = vpack.c.b16 %v518, %v517
        %v526 = vpack.c.b16 %v520, %v519
        %v527 = vpack.c.b16 %v522, %v521
        %v528 = vpack.c.b16 %v524, %v523
        %v534 = vsel %vm447, %v505, 0
        %v537 = vsel %vm447, %v506, 0
        %v540 = vsel %vm447, %v507, 0
        %v543 = vsel %vm447, %v508, 0
        %545 = vmatpush.bf16.msra.mxu0 0
        %546 = vmatpush.bf16.msra.mxu0 0
        %547 = vmatpush.bf16.msra.mxu0 0
        %548 = vmatpush.bf16.msra.mxu0 0
        %549 = vmatpush.bf16.msra.mxu0 %v528
        %550 = vmatpush.bf16.msra.mxu0 %v527
        %551 = vmatpush.bf16.msra.mxu0 %v526
        %552 = vmatpush.bf16.msra.mxu0 %v525
        %553 = vmatmul.bf16.gmra.mxu0 %v534
        %v554 = vpop.f32.mrf.mxu0
        %v555 = vadd.f32 %v470, %v554
        %v556 = vpop.f32.mrf.mxu0
        %v557 = vadd.f32 %v472, %v556
        %558 = vmatmul.bf16.gmra.mxu0 %v537
        %v559 = vpop.f32.mrf.mxu0
        %v560 = vadd.f32 %v475, %v559
        %v561 = vpop.f32.mrf.mxu0
        %v562 = vadd.f32 %v477, %v561
        %563 = vmatmul.bf16.gmra.mxu0 %v540
        %v564 = vpop.f32.mrf.mxu0
        %v565 = vadd.f32 %v480, %v564
        %v566 = vpop.f32.mrf.mxu0
        %v567 = vadd.f32 %v482, %v566
        %568 = vmatmul.bf16.gmra.mxu0 %v543
        %v569 = vpop.f32.mrf.mxu0
        %v570 = vadd.f32 %v485, %v569
        %v571 = vpop.f32.mrf.mxu0
        %v572 = vadd.f32 %v487, %v571
        %573 = vdwg.mxu0
        %v574 = vld [vmem:[%s255] sm:$0xe]
        %v575 = vld [vmem:[%s255 + $0x8] sm:$0xe]
        %v576 = vld [vmem:[%s255 + $0x10] sm:$0xe]
        %v577 = vld [vmem:[%s255 + $0x18] sm:$0xe]
        %v578 = vld [vmem:[%s255 + $0x20] sm:$0xe]
        %v579 = vld [vmem:[%s255 + $0x28] sm:$0xe]
        %v580 = vld [vmem:[%s255 + $0x30] sm:$0xe]
        %v581 = vld [vmem:[%s255 + $0x38] sm:$0xe]
        %vm598 = vcmask 1042432
        %vm599 = vcmask 1046532
        %vm600 = vmor %vm598, %vm599
        %v601 = vrot.slane %v574, 5
        %v602 = vrot.slane %v601, 4
        %v603 = vrot.slane %v279, 5
        %v604 = vsel %vm600, %v602, %v603
        %v605 = vrot.slane %v575, 5
        %v606 = vrot.slane %v605, 4
        %v607 = vrot.slane %v280, 5
        %v608 = vsel %vm600, %v606, %v607
        %v609 = vrot.slane %v576, 5
        %v610 = vrot.slane %v609, 4
        %v611 = vrot.slane %v281, 5
        %v612 = vsel %vm600, %v610, %v611
        %v613 = vrot.slane %v577, 5
        %v614 = vrot.slane %v613, 4
        %v615 = vrot.slane %v282, 5
        %v616 = vsel %vm600, %v614, %v615
        %v617 = vrot.slane %v578, 5
        %v618 = vrot.slane %v617, 4
        %v619 = vrot.slane %v283, 5
        %v620 = vsel %vm600, %v618, %v619
        %v621 = vrot.slane %v579, 5
        %v622 = vrot.slane %v621, 4
        %v623 = vrot.slane %v284, 5
        %v624 = vsel %vm600, %v622, %v623
        %v625 = vrot.slane %v580, 5
        %v626 = vrot.slane %v625, 4
        %v627 = vrot.slane %v285, 5
        %v628 = vsel %vm600, %v626, %v627
        %v629 = vrot.slane %v581, 5
        %v630 = vrot.slane %v629, 4
        %v631 = vrot.slane %v286, 5
        %v632 = vsel %vm600, %v630, %v631
        %s633 = scalar_lea.vmem [#allocation2], 64
        %v634 = vld [vmem:[%s633] sm:$0xf]
        %v635 = vld [vmem:[%s633 + $0x4] sm:$0xf]
        %v636 = vld [vmem:[%s633 + $0x8] sm:$0xf]
        %v637 = vld [vmem:[%s633 + $0xc] sm:$0xf]
        %v638 = vld [vmem:[%s633 + $0x10] sm:$0xf]
        %v639 = vld [vmem:[%s633 + $0x14] sm:$0xf]
        %v640 = vld [vmem:[%s633 + $0x18] sm:$0xf]
        %v641 = vld [vmem:[%s633 + $0x1c] sm:$0xf]
        %v642 = vunpack.c.l.b16 %v604
        %v643 = vunpack.c.l.b16 %v608
        %v644 = vunpack.c.l.b16 %v612
        %v645 = vunpack.c.l.b16 %v616
        %v646 = vunpack.c.l.b16 %v620
        %v647 = vunpack.c.l.b16 %v624
        %v648 = vunpack.c.l.b16 %v628
        %v649 = vunpack.c.l.b16 %v632
        %v650 = vpack.c.b16 %v643, %v642
        %v651 = vpack.c.b16 %v645, %v644
        %v652 = vpack.c.b16 %v647, %v646
        %v653 = vpack.c.b16 %v649, %v648
        %v662 = vunpack.c.l.b16 %v634
        %v663 = vunpack.c.l.b16 %v635
        %v664 = vunpack.c.l.b16 %v636
        %v665 = vunpack.c.l.b16 %v637
        %v666 = vunpack.c.l.b16 %v638
        %v667 = vunpack.c.l.b16 %v639
        %v668 = vunpack.c.l.b16 %v640
        %v669 = vunpack.c.l.b16 %v641
        %v670 = vpack.c.b16 %v663, %v662
        %v671 = vpack.c.b16 %v665, %v664
        %v672 = vpack.c.b16 %v667, %v666
        %v673 = vpack.c.b16 %v669, %v668
        %v679 = vsel %vm447, %v650, 0
        %v682 = vsel %vm447, %v651, 0
        %v685 = vsel %vm447, %v652, 0
        %v688 = vsel %vm447, %v653, 0
        %690 = vmatpush.bf16.msra.mxu0 0
        %691 = vmatpush.bf16.msra.mxu0 0
        %692 = vmatpush.bf16.msra.mxu0 0
        %693 = vmatpush.bf16.msra.mxu0 0
        %694 = vmatpush.bf16.msra.mxu0 %v673
        %695 = vmatpush.bf16.msra.mxu0 %v672
        %696 = vmatpush.bf16.msra.mxu0 %v671
        %697 = vmatpush.bf16.msra.mxu0 %v670
        %698 = vmatmul.bf16.gmra.mxu0 %v679
        %v699 = vpop.f32.mrf.mxu0
        %v700 = vadd.f32 0.0, %v699
        %v701 = vpop.f32.mrf.mxu0
        %v702 = vadd.f32 0.0, %v701
        %703 = vmatmul.bf16.gmra.mxu0 %v682
        %v704 = vpop.f32.mrf.mxu0
        %v705 = vadd.f32 0.0, %v704
        %v706 = vpop.f32.mrf.mxu0
        %v707 = vadd.f32 0.0, %v706
        %708 = vmatmul.bf16.gmra.mxu0 %v685
        %v709 = vpop.f32.mrf.mxu0
        %v710 = vadd.f32 0.0, %v709
        %v711 = vpop.f32.mrf.mxu0
        %v712 = vadd.f32 0.0, %v711
        %713 = vmatmul.bf16.gmra.mxu0 %v688
        %v714 = vpop.f32.mrf.mxu0
        %v715 = vadd.f32 0.0, %v714
        %v716 = vpop.f32.mrf.mxu0
        %v717 = vadd.f32 0.0, %v716
        %718 = vdwg.mxu0
        %v719 = vadd.f32 %v555, %v700
        %v720 = vadd.f32 %v557, %v702
        %v721 = vadd.f32 %v560, %v705
        %v722 = vadd.f32 %v562, %v707
        %v723 = vadd.f32 %v565, %v710
        %v724 = vadd.f32 %v567, %v712
        %v725 = vadd.f32 %v570, %v715
        %v726 = vadd.f32 %v572, %v717
        %s727 = scalar_lea.vmem %s255, 8
        %v728 = vld [vmem:[%s727] sm:$0xf]
        %v729 = vld [vmem:[%s727 + $0x8] sm:$0xf]
        %v730 = vld [vmem:[%s727 + $0x10] sm:$0xf]
        %v731 = vld [vmem:[%s727 + $0x18] sm:$0xf]
        %v732 = vld [vmem:[%s727 + $0x20] sm:$0xf]
        %v733 = vld [vmem:[%s727 + $0x28] sm:$0xf]
        %v734 = vld [vmem:[%s727 + $0x30] sm:$0xf]
        %v735 = vld [vmem:[%s727 + $0x38] sm:$0xf]
        %s736 = scalar_lea.vmem [#allocation2], 96
        %v737 = vld [vmem:[%s736] sm:$0xf]
        %v738 = vld [vmem:[%s736 + $0x4] sm:$0xf]
        %v739 = vld [vmem:[%s736 + $0x8] sm:$0xf]
        %v740 = vld [vmem:[%s736 + $0xc] sm:$0xf]
        %v741 = vld [vmem:[%s736 + $0x10] sm:$0xf]
        %v742 = vld [vmem:[%s736 + $0x14] sm:$0xf]
        %v743 = vld [vmem:[%s736 + $0x18] sm:$0xf]
        %v744 = vld [vmem:[%s736 + $0x1c] sm:$0xf]
        %v753 = vunpack.c.l.b16 %v728
        %v754 = vunpack.c.l.b16 %v729
        %v755 = vunpack.c.l.b16 %v730
        %v756 = vunpack.c.l.b16 %v731
        %v757 = vunpack.c.l.b16 %v732
        %v758 = vunpack.c.l.b16 %v733
        %v759 = vunpack.c.l.b16 %v734
        %v760 = vunpack.c.l.b16 %v735
        %v761 = vpack.c.b16 %v754, %v753
        %v762 = vpack.c.b16 %v756, %v755
        %v763 = vpack.c.b16 %v758, %v757
        %v764 = vpack.c.b16 %v760, %v759
        %v773 = vunpack.c.l.b16 %v737
        %v774 = vunpack.c.l.b16 %v738
        %v775 = vunpack.c.l.b16 %v739
        %v776 = vunpack.c.l.b16 %v740
        %v777 = vunpack.c.l.b16 %v741
        %v778 = vunpack.c.l.b16 %v742
        %v779 = vunpack.c.l.b16 %v743
        %v780 = vunpack.c.l.b16 %v744
        %v781 = vpack.c.b16 %v774, %v773
        %v782 = vpack.c.b16 %v776, %v775
        %v783 = vpack.c.b16 %v778, %v777
        %v784 = vpack.c.b16 %v780, %v779
        %v790 = vsel %vm447, %v761, 0
        %v793 = vsel %vm447, %v762, 0
        %v796 = vsel %vm447, %v763, 0
        %v799 = vsel %vm447, %v764, 0
        %801 = vmatpush.bf16.msra.mxu0 0
        %802 = vmatpush.bf16.msra.mxu0 0
        %803 = vmatpush.bf16.msra.mxu0 0
        %804 = vmatpush.bf16.msra.mxu0 0
        %805 = vmatpush.bf16.msra.mxu0 %v784
        %806 = vmatpush.bf16.msra.mxu0 %v783
        %807 = vmatpush.bf16.msra.mxu0 %v782
        %808 = vmatpush.bf16.msra.mxu0 %v781
        %809 = vmatmul.bf16.gmra.mxu0 %v790
        %v810 = vpop.f32.mrf.mxu0
        %v811 = vadd.f32 0.0, %v810
        %v812 = vpop.f32.mrf.mxu0
        %v813 = vadd.f32 0.0, %v812
        %814 = vmatmul.bf16.gmra.mxu0 %v793
        %v815 = vpop.f32.mrf.mxu0
        %v816 = vadd.f32 0.0, %v815
        %v817 = vpop.f32.mrf.mxu0
        %v818 = vadd.f32 0.0, %v817
        %819 = vmatmul.bf16.gmra.mxu0 %v796
        %v820 = vpop.f32.mrf.mxu0
        %v821 = vadd.f32 0.0, %v820
        %v822 = vpop.f32.mrf.mxu0
        %v823 = vadd.f32 0.0, %v822
        %824 = vmatmul.bf16.gmra.mxu0 %v799
        %v825 = vpop.f32.mrf.mxu0
        %v826 = vadd.f32 0.0, %v825
        %v827 = vpop.f32.mrf.mxu0
        %v828 = vadd.f32 0.0, %v827
        %829 = vdwg.mxu0
        %v830 = vadd.f32 %v719, %v811
        %v831 = vadd.f32 %v720, %v813
        %v832 = vadd.f32 %v721, %v816
        %v833 = vadd.f32 %v722, %v818
        %v834 = vadd.f32 %v723, %v821
        %v835 = vadd.f32 %v724, %v823
        %v836 = vadd.f32 %v725, %v826
        %v837 = vadd.f32 %v726, %v828
        %v838 = vld [vmem:[%s727] sm:$0xf]
        %v839 = vld [vmem:[%s727 + $0x4] sm:$0x1]
        %v840 = vld [vmem:[%s727 + $0x8] sm:$0xf]
        %v841 = vld [vmem:[%s727 + $0xc] sm:$0x1]
        %v842 = vld [vmem:[%s727 + $0x10] sm:$0xf]
        %v843 = vld [vmem:[%s727 + $0x14] sm:$0x1]
        %v844 = vld [vmem:[%s727 + $0x18] sm:$0xf]
        %v845 = vld [vmem:[%s727 + $0x1c] sm:$0x1]
        %v846 = vld [vmem:[%s727 + $0x20] sm:$0xf]
        %v847 = vld [vmem:[%s727 + $0x24] sm:$0x1]
        %v848 = vld [vmem:[%s727 + $0x28] sm:$0xf]
        %v849 = vld [vmem:[%s727 + $0x2c] sm:$0x1]
        %v850 = vld [vmem:[%s727 + $0x30] sm:$0xf]
        %v851 = vld [vmem:[%s727 + $0x34] sm:$0x1]
        %v852 = vld [vmem:[%s727 + $0x38] sm:$0xf]
        %v853 = vld [vmem:[%s727 + $0x3c] sm:$0x1]
        %v855 = vshrl.u32 %v838, 16
        %v857 = vrot.slane %v855, 4
        %v858 = vshll.u32 %v838, 16
        %v860 = vrot.slane %v858, 5
        %v861 = vor.u32 %v857, %v860
        %v862 = vrot.slane %v861, 4
        %v864 = vshll.u32 %v839, 16
        %v866 = vrot.slane %v864, 5
        %v867 = vsel %vm289, %v862, %v866
        %v869 = vshrl.u32 %v840, 16
        %v871 = vrot.slane %v869, 4
        %v872 = vshll.u32 %v840, 16
        %v874 = vrot.slane %v872, 5
        %v875 = vor.u32 %v871, %v874
        %v876 = vrot.slane %v875, 4
        %v878 = vshll.u32 %v841, 16
        %v880 = vrot.slane %v878, 5
        %v881 = vsel %vm289, %v876, %v880
        %v883 = vshrl.u32 %v842, 16
        %v885 = vrot.slane %v883, 4
        %v886 = vshll.u32 %v842, 16
        %v888 = vrot.slane %v886, 5
        %v889 = vor.u32 %v885, %v888
        %v890 = vrot.slane %v889, 4
        %v892 = vshll.u32 %v843, 16
        %v894 = vrot.slane %v892, 5
        %v895 = vsel %vm289, %v890, %v894
        %v897 = vshrl.u32 %v844, 16
        %v899 = vrot.slane %v897, 4
        %v900 = vshll.u32 %v844, 16
        %v902 = vrot.slane %v900, 5
        %v903 = vor.u32 %v899, %v902
        %v904 = vrot.slane %v903, 4
        %v906 = vshll.u32 %v845, 16
        %v908 = vrot.slane %v906, 5
        %v909 = vsel %vm289, %v904, %v908
        %v911 = vshrl.u32 %v846, 16
        %v913 = vrot.slane %v911, 4
        %v914 = vshll.u32 %v846, 16
        %v916 = vrot.slane %v914, 5
        %v917 = vor.u32 %v913, %v916
        %v918 = vrot.slane %v917, 4
        %v920 = vshll.u32 %v847, 16
        %v922 = vrot.slane %v920, 5
        %v923 = vsel %vm289, %v918, %v922
        %v925 = vshrl.u32 %v848, 16
        %v927 = vrot.slane %v925, 4
        %v928 = vshll.u32 %v848, 16
        %v930 = vrot.slane %v928, 5
        %v931 = vor.u32 %v927, %v930
        %v932 = vrot.slane %v931, 4
        %v934 = vshll.u32 %v849, 16
        %v936 = vrot.slane %v934, 5
        %v937 = vsel %vm289, %v932, %v936
        %v939 = vshrl.u32 %v850, 16
        %v941 = vrot.slane %v939, 4
        %v942 = vshll.u32 %v850, 16
        %v944 = vrot.slane %v942, 5
        %v945 = vor.u32 %v941, %v944
        %v946 = vrot.slane %v945, 4
        %v948 = vshll.u32 %v851, 16
        %v950 = vrot.slane %v948, 5
        %v951 = vsel %vm289, %v946, %v950
        %v953 = vshrl.u32 %v852, 16
        %v955 = vrot.slane %v953, 4
        %v956 = vshll.u32 %v852, 16
        %v958 = vrot.slane %v956, 5
        %v959 = vor.u32 %v955, %v958
        %v960 = vrot.slane %v959, 4
        %v962 = vshll.u32 %v853, 16
        %v964 = vrot.slane %v962, 5
        %v965 = vsel %vm289, %v960, %v964
        %s966 = scalar_lea.vmem [#allocation2], 128
        %v967 = vld [vmem:[%s966] sm:$0xf]
        %v968 = vld [vmem:[%s966 + $0x4] sm:$0xf]
        %v969 = vld [vmem:[%s966 + $0x8] sm:$0xf]
        %v970 = vld [vmem:[%s966 + $0xc] sm:$0xf]
        %v971 = vld [vmem:[%s966 + $0x10] sm:$0xf]
        %v972 = vld [vmem:[%s966 + $0x14] sm:$0xf]
        %v973 = vld [vmem:[%s966 + $0x18] sm:$0xf]
        %v974 = vld [vmem:[%s966 + $0x1c] sm:$0xf]
        %v975 = vunpack.c.l.b16 %v867
        %v976 = vunpack.c.l.b16 %v881
        %v977 = vunpack.c.l.b16 %v895
        %v978 = vunpack.c.l.b16 %v909
        %v979 = vunpack.c.l.b16 %v923
        %v980 = vunpack.c.l.b16 %v937
        %v981 = vunpack.c.l.b16 %v951
        %v982 = vunpack.c.l.b16 %v965
        %v983 = vpack.c.b16 %v976, %v975
        %v984 = vpack.c.b16 %v978, %v977
        %v985 = vpack.c.b16 %v980, %v979
        %v986 = vpack.c.b16 %v982, %v981
        %v995 = vunpack.c.l.b16 %v967
        %v996 = vunpack.c.l.b16 %v968
        %v997 = vunpack.c.l.b16 %v969
        %v998 = vunpack.c.l.b16 %v970
        %v999 = vunpack.c.l.b16 %v971
        %v1000 = vunpack.c.l.b16 %v972
        %v1001 = vunpack.c.l.b16 %v973
        %v1002 = vunpack.c.l.b16 %v974
        %v1003 = vpack.c.b16 %v996, %v995
        %v1004 = vpack.c.b16 %v998, %v997
        %v1005 = vpack.c.b16 %v1000, %v999
        %v1006 = vpack.c.b16 %v1002, %v1001
        %v1012 = vsel %vm447, %v983, 0
        %v1015 = vsel %vm447, %v984, 0
        %v1018 = vsel %vm447, %v985, 0
        %v1021 = vsel %vm447, %v986, 0
        %1023 = vmatpush.bf16.msra.mxu0 0
        %1024 = vmatpush.bf16.msra.mxu0 0
        %1025 = vmatpush.bf16.msra.mxu0 0
        %1026 = vmatpush.bf16.msra.mxu0 0
        %1027 = vmatpush.bf16.msra.mxu0 %v1006
        %1028 = vmatpush.bf16.msra.mxu0 %v1005
        %1029 = vmatpush.bf16.msra.mxu0 %v1004
        %1030 = vmatpush.bf16.msra.mxu0 %v1003
        %1031 = vmatmul.bf16.gmra.mxu0 %v1012
        %v1032 = vpop.f32.mrf.mxu0
        %v1033 = vadd.f32 0.0, %v1032
        %v1034 = vpop.f32.mrf.mxu0
        %v1035 = vadd.f32 0.0, %v1034
        %1036 = vmatmul.bf16.gmra.mxu0 %v1015
        %v1037 = vpop.f32.mrf.mxu0
        %v1038 = vadd.f32 0.0, %v1037
        %v1039 = vpop.f32.mrf.mxu0
        %v1040 = vadd.f32 0.0, %v1039
        %1041 = vmatmul.bf16.gmra.mxu0 %v1018
        %v1042 = vpop.f32.mrf.mxu0
        %v1043 = vadd.f32 0.0, %v1042
        %v1044 = vpop.f32.mrf.mxu0
        %v1045 = vadd.f32 0.0, %v1044
        %1046 = vmatmul.bf16.gmra.mxu0 %v1021
        %v1047 = vpop.f32.mrf.mxu0
        %v1048 = vadd.f32 0.0, %v1047
        %v1049 = vpop.f32.mrf.mxu0
        %v1050 = vadd.f32 0.0, %v1049
        %1051 = vdwg.mxu0
        %v1052 = vadd.f32 %v830, %v1033
        %v1053 = vadd.f32 %v831, %v1035
        %v1054 = vadd.f32 %v832, %v1038
        %v1055 = vadd.f32 %v833, %v1040
        %v1056 = vadd.f32 %v834, %v1043
        %v1057 = vadd.f32 %v835, %v1045
        %v1058 = vadd.f32 %v836, %v1048
        %v1059 = vadd.f32 %v837, %v1050
        %v1060 = vld [vmem:[%s727] sm:$0xe]
        %v1061 = vld [vmem:[%s727 + $0x8] sm:$0xe]
        %v1062 = vld [vmem:[%s727 + $0x10] sm:$0xe]
        %v1063 = vld [vmem:[%s727 + $0x18] sm:$0xe]
        %v1064 = vld [vmem:[%s727 + $0x20] sm:$0xe]
        %v1065 = vld [vmem:[%s727 + $0x28] sm:$0xe]
        %v1066 = vld [vmem:[%s727 + $0x30] sm:$0xe]
        %v1067 = vld [vmem:[%s727 + $0x38] sm:$0xe]
        %v1084 = vrot.slane %v1060, 5
        %v1085 = vrot.slane %v1084, 4
        %v1086 = vrot.slane %v839, 5
        %v1087 = vsel %vm600, %v1085, %v1086
        %v1088 = vrot.slane %v1061, 5
        %v1089 = vrot.slane %v1088, 4
        %v1090 = vrot.slane %v841, 5
        %v1091 = vsel %vm600, %v1089, %v1090
        %v1092 = vrot.slane %v1062, 5
        %v1093 = vrot.slane %v1092, 4
        %v1094 = vrot.slane %v843, 5
        %v1095 = vsel %vm600, %v1093, %v1094
        %v1096 = vrot.slane %v1063, 5
        %v1097 = vrot.slane %v1096, 4
        %v1098 = vrot.slane %v845, 5
        %v1099 = vsel %vm600, %v1097, %v1098
        %v1100 = vrot.slane %v1064, 5
        %v1101 = vrot.slane %v1100, 4
        %v1102 = vrot.slane %v847, 5
        %v1103 = vsel %vm600, %v1101, %v1102
        %v1104 = vrot.slane %v1065, 5
        %v1105 = vrot.slane %v1104, 4
        %v1106 = vrot.slane %v849, 5
        %v1107 = vsel %vm600, %v1105, %v1106
        %v1108 = vrot.slane %v1066, 5
        %v1109 = vrot.slane %v1108, 4
        %v1110 = vrot.slane %v851, 5
        %v1111 = vsel %vm600, %v1109, %v1110
        %v1112 = vrot.slane %v1067, 5
        %v1113 = vrot.slane %v1112, 4
        %v1114 = vrot.slane %v853, 5
        %v1115 = vsel %vm600, %v1113, %v1114
        %s1116 = scalar_lea.vmem [#allocation2], 160
        %v1117 = vld [vmem:[%s1116] sm:$0xf]
        %v1118 = vld [vmem:[%s1116 + $0x4] sm:$0xf]
        %v1119 = vld [vmem:[%s1116 + $0x8] sm:$0xf]
        %v1120 = vld [vmem:[%s1116 + $0xc] sm:$0xf]
        %v1121 = vld [vmem:[%s1116 + $0x10] sm:$0xf]
        %v1122 = vld [vmem:[%s1116 + $0x14] sm:$0xf]
        %v1123 = vld [vmem:[%s1116 + $0x18] sm:$0xf]
        %v1124 = vld [vmem:[%s1116 + $0x1c] sm:$0xf]
        %v1125 = vunpack.c.l.b16 %v1087
        %v1126 = vunpack.c.l.b16 %v1091
        %v1127 = vunpack.c.l.b16 %v1095
        %v1128 = vunpack.c.l.b16 %v1099
        %v1129 = vunpack.c.l.b16 %v1103
        %v1130 = vunpack.c.l.b16 %v1107
        %v1131 = vunpack.c.l.b16 %v1111
        %v1132 = vunpack.c.l.b16 %v1115
        %v1133 = vpack.c.b16 %v1126, %v1125
        %v1134 = vpack.c.b16 %v1128, %v1127
        %v1135 = vpack.c.b16 %v1130, %v1129
        %v1136 = vpack.c.b16 %v1132, %v1131
        %v1145 = vunpack.c.l.b16 %v1117
        %v1146 = vunpack.c.l.b16 %v1118
        %v1147 = vunpack.c.l.b16 %v1119
        %v1148 = vunpack.c.l.b16 %v1120
        %v1149 = vunpack.c.l.b16 %v1121
        %v1150 = vunpack.c.l.b16 %v1122
        %v1151 = vunpack.c.l.b16 %v1123
        %v1152 = vunpack.c.l.b16 %v1124
        %v1153 = vpack.c.b16 %v1146, %v1145
        %v1154 = vpack.c.b16 %v1148, %v1147
        %v1155 = vpack.c.b16 %v1150, %v1149
        %v1156 = vpack.c.b16 %v1152, %v1151
        %v1162 = vsel %vm447, %v1133, 0
        %v1165 = vsel %vm447, %v1134, 0
        %v1168 = vsel %vm447, %v1135, 0
        %v1171 = vsel %vm447, %v1136, 0
        %1173 = vmatpush.bf16.msra.mxu0 0
        %1174 = vmatpush.bf16.msra.mxu0 0
        %1175 = vmatpush.bf16.msra.mxu0 0
        %1176 = vmatpush.bf16.msra.mxu0 0
        %1177 = vmatpush.bf16.msra.mxu0 %v1156
        %1178 = vmatpush.bf16.msra.mxu0 %v1155
        %1179 = vmatpush.bf16.msra.mxu0 %v1154
        %1180 = vmatpush.bf16.msra.mxu0 %v1153
        %1181 = vmatmul.bf16.gmra.mxu0 %v1162
        %v1182 = vpop.f32.mrf.mxu0
        %v1183 = vadd.f32 0.0, %v1182
        %v1184 = vpop.f32.mrf.mxu0
        %v1185 = vadd.f32 0.0, %v1184
        %1186 = vmatmul.bf16.gmra.mxu0 %v1165
        %v1187 = vpop.f32.mrf.mxu0
        %v1188 = vadd.f32 0.0, %v1187
        %v1189 = vpop.f32.mrf.mxu0
        %v1190 = vadd.f32 0.0, %v1189
        %1191 = vmatmul.bf16.gmra.mxu0 %v1168
        %v1192 = vpop.f32.mrf.mxu0
        %v1193 = vadd.f32 0.0, %v1192
        %v1194 = vpop.f32.mrf.mxu0
        %v1195 = vadd.f32 0.0, %v1194
        %1196 = vmatmul.bf16.gmra.mxu0 %v1171
        %v1197 = vpop.f32.mrf.mxu0
        %v1198 = vadd.f32 0.0, %v1197
        %v1199 = vpop.f32.mrf.mxu0
        %v1200 = vadd.f32 0.0, %v1199
        %1201 = vdwg.mxu0
        %v1202 = vadd.f32 %v1052, %v1183
        %v1203 = vadd.f32 %v1053, %v1185
        %v1204 = vadd.f32 %v1054, %v1188
        %v1205 = vadd.f32 %v1055, %v1190
        %v1206 = vadd.f32 %v1056, %v1193
        %v1207 = vadd.f32 %v1057, %v1195
        %v1208 = vadd.f32 %v1058, %v1198
        %v1209 = vadd.f32 %v1059, %v1200
        %s1210 = scalar_lea.vmem %s255, 16
        %v1211 = vld [vmem:[%s1210] sm:$0xf]
        %v1212 = vld [vmem:[%s1210 + $0x8] sm:$0xf]
        %v1213 = vld [vmem:[%s1210 + $0x10] sm:$0xf]
        %v1214 = vld [vmem:[%s1210 + $0x18] sm:$0xf]
        %v1215 = vld [vmem:[%s1210 + $0x20] sm:$0xf]
        %v1216 = vld [vmem:[%s1210 + $0x28] sm:$0xf]
        %v1217 = vld [vmem:[%s1210 + $0x30] sm:$0xf]
        %v1218 = vld [vmem:[%s1210 + $0x38] sm:$0xf]
        %s1219 = scalar_lea.vmem [#allocation2], 192
        %v1220 = vld [vmem:[%s1219] sm:$0xf]
        %v1221 = vld [vmem:[%s1219 + $0x4] sm:$0xf]
        %v1222 = vld [vmem:[%s1219 + $0x8] sm:$0xf]
        %v1223 = vld [vmem:[%s1219 + $0xc] sm:$0xf]
        %v1224 = vld [vmem:[%s1219 + $0x10] sm:$0xf]
        %v1225 = vld [vmem:[%s1219 + $0x14] sm:$0xf]
        %v1226 = vld [vmem:[%s1219 + $0x18] sm:$0xf]
        %v1227 = vld [vmem:[%s1219 + $0x1c] sm:$0xf]
        %v1236 = vunpack.c.l.b16 %v1211
        %v1237 = vunpack.c.l.b16 %v1212
        %v1238 = vunpack.c.l.b16 %v1213
        %v1239 = vunpack.c.l.b16 %v1214
        %v1240 = vunpack.c.l.b16 %v1215
        %v1241 = vunpack.c.l.b16 %v1216
        %v1242 = vunpack.c.l.b16 %v1217
        %v1243 = vunpack.c.l.b16 %v1218
        %v1244 = vpack.c.b16 %v1237, %v1236
        %v1245 = vpack.c.b16 %v1239, %v1238
        %v1246 = vpack.c.b16 %v1241, %v1240
        %v1247 = vpack.c.b16 %v1243, %v1242
        %v1256 = vunpack.c.l.b16 %v1220
        %v1257 = vunpack.c.l.b16 %v1221
        %v1258 = vunpack.c.l.b16 %v1222
        %v1259 = vunpack.c.l.b16 %v1223
        %v1260 = vunpack.c.l.b16 %v1224
        %v1261 = vunpack.c.l.b16 %v1225
        %v1262 = vunpack.c.l.b16 %v1226
        %v1263 = vunpack.c.l.b16 %v1227
        %v1264 = vpack.c.b16 %v1257, %v1256
        %v1265 = vpack.c.b16 %v1259, %v1258
        %v1266 = vpack.c.b16 %v1261, %v1260
        %v1267 = vpack.c.b16 %v1263, %v1262
        %v1273 = vsel %vm447, %v1244, 0
        %v1276 = vsel %vm447, %v1245, 0
        %v1279 = vsel %vm447, %v1246, 0
        %v1282 = vsel %vm447, %v1247, 0
        %1284 = vmatpush.bf16.msra.mxu0 0
        %1285 = vmatpush.bf16.msra.mxu0 0
        %1286 = vmatpush.bf16.msra.mxu0 0
        %1287 = vmatpush.bf16.msra.mxu0 0
        %1288 = vmatpush.bf16.msra.mxu0 %v1267
        %1289 = vmatpush.bf16.msra.mxu0 %v1266
        %1290 = vmatpush.bf16.msra.mxu0 %v1265
        %1291 = vmatpush.bf16.msra.mxu0 %v1264
        %1292 = vmatmul.bf16.gmra.mxu0 %v1273
        %v1293 = vpop.f32.mrf.mxu0
        %v1294 = vadd.f32 0.0, %v1293
        %v1295 = vpop.f32.mrf.mxu0
        %v1296 = vadd.f32 0.0, %v1295
        %1297 = vmatmul.bf16.gmra.mxu0 %v1276
        %v1298 = vpop.f32.mrf.mxu0
        %v1299 = vadd.f32 0.0, %v1298
        %v1300 = vpop.f32.mrf.mxu0
        %v1301 = vadd.f32 0.0, %v1300
        %1302 = vmatmul.bf16.gmra.mxu0 %v1279
        %v1303 = vpop.f32.mrf.mxu0
        %v1304 = vadd.f32 0.0, %v1303
        %v1305 = vpop.f32.mrf.mxu0
        %v1306 = vadd.f32 0.0, %v1305
        %1307 = vmatmul.bf16.gmra.mxu0 %v1282
        %v1308 = vpop.f32.mrf.mxu0
        %v1309 = vadd.f32 0.0, %v1308
        %v1310 = vpop.f32.mrf.mxu0
        %v1311 = vadd.f32 0.0, %v1310
        %1312 = vdwg.mxu0
        %v1313 = vadd.f32 %v1202, %v1294
        %v1314 = vadd.f32 %v1203, %v1296
        %v1315 = vadd.f32 %v1204, %v1299
        %v1316 = vadd.f32 %v1205, %v1301
        %v1317 = vadd.f32 %v1206, %v1304
        %v1318 = vadd.f32 %v1207, %v1306
        %v1319 = vadd.f32 %v1208, %v1309
        %v1320 = vadd.f32 %v1209, %v1311
        %v1321 = vld [vmem:[%s1210] sm:$0xf]
        %v1322 = vld [vmem:[%s1210 + $0x4] sm:$0x1]
        %v1323 = vld [vmem:[%s1210 + $0x8] sm:$0xf]
        %v1324 = vld [vmem:[%s1210 + $0xc] sm:$0x1]
        %v1325 = vld [vmem:[%s1210 + $0x10] sm:$0xf]
        %v1326 = vld [vmem:[%s1210 + $0x14] sm:$0x1]
        %v1327 = vld [vmem:[%s1210 + $0x18] sm:$0xf]
        %v1328 = vld [vmem:[%s1210 + $0x1c] sm:$0x1]
        %v1329 = vld [vmem:[%s1210 + $0x20] sm:$0xf]
        %v1330 = vld [vmem:[%s1210 + $0x24] sm:$0x1]
        %v1331 = vld [vmem:[%s1210 + $0x28] sm:$0xf]
        %v1332 = vld [vmem:[%s1210 + $0x2c] sm:$0x1]
        %v1333 = vld [vmem:[%s1210 + $0x30] sm:$0xf]
        %v1334 = vld [vmem:[%s1210 + $0x34] sm:$0x1]
        %v1335 = vld [vmem:[%s1210 + $0x38] sm:$0xf]
        %v1336 = vld [vmem:[%s1210 + $0x3c] sm:$0x1]
        %v1338 = vshrl.u32 %v1321, 16
        %v1340 = vrot.slane %v1338, 4
        %v1341 = vshll.u32 %v1321, 16
        %v1343 = vrot.slane %v1341, 5
        %v1344 = vor.u32 %v1340, %v1343
        %v1345 = vrot.slane %v1344, 4
        %v1347 = vshll.u32 %v1322, 16
        %v1349 = vrot.slane %v1347, 5
        %v1350 = vsel %vm289, %v1345, %v1349
        %v1352 = vshrl.u32 %v1323, 16
        %v1354 = vrot.slane %v1352, 4
        %v1355 = vshll.u32 %v1323, 16
        %v1357 = vrot.slane %v1355, 5
        %v1358 = vor.u32 %v1354, %v1357
        %v1359 = vrot.slane %v1358, 4
        %v1361 = vshll.u32 %v1324, 16
        %v1363 = vrot.slane %v1361, 5
        %v1364 = vsel %vm289, %v1359, %v1363
        %v1366 = vshrl.u32 %v1325, 16
        %v1368 = vrot.slane %v1366, 4
        %v1369 = vshll.u32 %v1325, 16
        %v1371 = vrot.slane %v1369, 5
        %v1372 = vor.u32 %v1368, %v1371
        %v1373 = vrot.slane %v1372, 4
        %v1375 = vshll.u32 %v1326, 16
        %v1377 = vrot.slane %v1375, 5
        %v1378 = vsel %vm289, %v1373, %v1377
        %v1380 = vshrl.u32 %v1327, 16
        %v1382 = vrot.slane %v1380, 4
        %v1383 = vshll.u32 %v1327, 16
        %v1385 = vrot.slane %v1383, 5
        %v1386 = vor.u32 %v1382, %v1385
        %v1387 = vrot.slane %v1386, 4
        %v1389 = vshll.u32 %v1328, 16
        %v1391 = vrot.slane %v1389, 5
        %v1392 = vsel %vm289, %v1387, %v1391
        %v1394 = vshrl.u32 %v1329, 16
        %v1396 = vrot.slane %v1394, 4
        %v1397 = vshll.u32 %v1329, 16
        %v1399 = vrot.slane %v1397, 5
        %v1400 = vor.u32 %v1396, %v1399
        %v1401 = vrot.slane %v1400, 4
        %v1403 = vshll.u32 %v1330, 16
        %v1405 = vrot.slane %v1403, 5
        %v1406 = vsel %vm289, %v1401, %v1405
        %v1408 = vshrl.u32 %v1331, 16
        %v1410 = vrot.slane %v1408, 4
        %v1411 = vshll.u32 %v1331, 16
        %v1413 = vrot.slane %v1411, 5
        %v1414 = vor.u32 %v1410, %v1413
        %v1415 = vrot.slane %v1414, 4
        %v1417 = vshll.u32 %v1332, 16
        %v1419 = vrot.slane %v1417, 5
        %v1420 = vsel %vm289, %v1415, %v1419
        %v1422 = vshrl.u32 %v1333, 16
        %v1424 = vrot.slane %v1422, 4
        %v1425 = vshll.u32 %v1333, 16
        %v1427 = vrot.slane %v1425, 5
        %v1428 = vor.u32 %v1424, %v1427
        %v1429 = vrot.slane %v1428, 4
        %v1431 = vshll.u32 %v1334, 16
        %v1433 = vrot.slane %v1431, 5
        %v1434 = vsel %vm289, %v1429, %v1433
        %v1436 = vshrl.u32 %v1335, 16
        %v1438 = vrot.slane %v1436, 4
        %v1439 = vshll.u32 %v1335, 16
        %v1441 = vrot.slane %v1439, 5
        %v1442 = vor.u32 %v1438, %v1441
        %v1443 = vrot.slane %v1442, 4
        %v1445 = vshll.u32 %v1336, 16
        %v1447 = vrot.slane %v1445, 5
        %v1448 = vsel %vm289, %v1443, %v1447
        %s1449 = scalar_lea.vmem [#allocation2], 224
        %v1450 = vld [vmem:[%s1449] sm:$0xf]
        %v1451 = vld [vmem:[%s1449 + $0x4] sm:$0xf]
        %v1452 = vld [vmem:[%s1449 + $0x8] sm:$0xf]
        %v1453 = vld [vmem:[%s1449 + $0xc] sm:$0xf]
        %v1454 = vld [vmem:[%s1449 + $0x10] sm:$0xf]
        %v1455 = vld [vmem:[%s1449 + $0x14] sm:$0xf]
        %v1456 = vld [vmem:[%s1449 + $0x18] sm:$0xf]
        %v1457 = vld [vmem:[%s1449 + $0x1c] sm:$0xf]
        %v1458 = vunpack.c.l.b16 %v1350
        %v1459 = vunpack.c.l.b16 %v1364
        %v1460 = vunpack.c.l.b16 %v1378
        %v1461 = vunpack.c.l.b16 %v1392
        %v1462 = vunpack.c.l.b16 %v1406
        %v1463 = vunpack.c.l.b16 %v1420
        %v1464 = vunpack.c.l.b16 %v1434
        %v1465 = vunpack.c.l.b16 %v1448
        %v1466 = vpack.c.b16 %v1459, %v1458
        %v1467 = vpack.c.b16 %v1461, %v1460
        %v1468 = vpack.c.b16 %v1463, %v1462
        %v1469 = vpack.c.b16 %v1465, %v1464
        %v1478 = vunpack.c.l.b16 %v1450
        %v1479 = vunpack.c.l.b16 %v1451
        %v1480 = vunpack.c.l.b16 %v1452
        %v1481 = vunpack.c.l.b16 %v1453
        %v1482 = vunpack.c.l.b16 %v1454
        %v1483 = vunpack.c.l.b16 %v1455
        %v1484 = vunpack.c.l.b16 %v1456
        %v1485 = vunpack.c.l.b16 %v1457
        %v1486 = vpack.c.b16 %v1479, %v1478
        %v1487 = vpack.c.b16 %v1481, %v1480
        %v1488 = vpack.c.b16 %v1483, %v1482
        %v1489 = vpack.c.b16 %v1485, %v1484
        %v1495 = vsel %vm447, %v1466, 0
        %v1498 = vsel %vm447, %v1467, 0
        %v1501 = vsel %vm447, %v1468, 0
        %v1504 = vsel %vm447, %v1469, 0
        %1506 = vmatpush.bf16.msra.mxu0 0
        %1507 = vmatpush.bf16.msra.mxu0 0
        %1508 = vmatpush.bf16.msra.mxu0 0
        %1509 = vmatpush.bf16.msra.mxu0 0
        %1510 = vmatpush.bf16.msra.mxu0 %v1489
        %1511 = vmatpush.bf16.msra.mxu0 %v1488
        %1512 = vmatpush.bf16.msra.mxu0 %v1487
        %1513 = vmatpush.bf16.msra.mxu0 %v1486
        %1514 = vmatmul.bf16.gmra.mxu0 %v1495
        %v1515 = vpop.f32.mrf.mxu0
        %v1516 = vadd.f32 0.0, %v1515
        %v1517 = vpop.f32.mrf.mxu0
        %v1518 = vadd.f32 0.0, %v1517
        %1519 = vmatmul.bf16.gmra.mxu0 %v1498
        %v1520 = vpop.f32.mrf.mxu0
        %v1521 = vadd.f32 0.0, %v1520
        %v1522 = vpop.f32.mrf.mxu0
        %v1523 = vadd.f32 0.0, %v1522
        %1524 = vmatmul.bf16.gmra.mxu0 %v1501
        %v1525 = vpop.f32.mrf.mxu0
        %v1526 = vadd.f32 0.0, %v1525
        %v1527 = vpop.f32.mrf.mxu0
        %v1528 = vadd.f32 0.0, %v1527
        %1529 = vmatmul.bf16.gmra.mxu0 %v1504
        %v1530 = vpop.f32.mrf.mxu0
        %v1531 = vadd.f32 0.0, %v1530
        %v1532 = vpop.f32.mrf.mxu0
        %v1533 = vadd.f32 0.0, %v1532
        %1534 = vdwg.mxu0
        %v1535 = vadd.f32 %v1313, %v1516
        %v1536 = vadd.f32 %v1314, %v1518
        %v1537 = vadd.f32 %v1315, %v1521
        %v1538 = vadd.f32 %v1316, %v1523
        %v1539 = vadd.f32 %v1317, %v1526
        %v1540 = vadd.f32 %v1318, %v1528
        %v1541 = vadd.f32 %v1319, %v1531
        %v1542 = vadd.f32 %v1320, %v1533
        %v1543 = vld [vmem:[%s1210] sm:$0xe]
        %v1544 = vld [vmem:[%s1210 + $0x8] sm:$0xe]
        %v1545 = vld [vmem:[%s1210 + $0x10] sm:$0xe]
        %v1546 = vld [vmem:[%s1210 + $0x18] sm:$0xe]
        %v1547 = vld [vmem:[%s1210 + $0x20] sm:$0xe]
        %v1548 = vld [vmem:[%s1210 + $0x28] sm:$0xe]
        %v1549 = vld [vmem:[%s1210 + $0x30] sm:$0xe]
        %v1550 = vld [vmem:[%s1210 + $0x38] sm:$0xe]
        %v1567 = vrot.slane %v1543, 5
        %v1568 = vrot.slane %v1567, 4
        %v1569 = vrot.slane %v1322, 5
        %v1570 = vsel %vm600, %v1568, %v1569
        %v1571 = vrot.slane %v1544, 5
        %v1572 = vrot.slane %v1571, 4
        %v1573 = vrot.slane %v1324, 5
        %v1574 = vsel %vm600, %v1572, %v1573
        %v1575 = vrot.slane %v1545, 5
        %v1576 = vrot.slane %v1575, 4
        %v1577 = vrot.slane %v1326, 5
        %v1578 = vsel %vm600, %v1576, %v1577
        %v1579 = vrot.slane %v1546, 5
        %v1580 = vrot.slane %v1579, 4
        %v1581 = vrot.slane %v1328, 5
        %v1582 = vsel %vm600, %v1580, %v1581
        %v1583 = vrot.slane %v1547, 5
        %v1584 = vrot.slane %v1583, 4
        %v1585 = vrot.slane %v1330, 5
        %v1586 = vsel %vm600, %v1584, %v1585
        %v1587 = vrot.slane %v1548, 5
        %v1588 = vrot.slane %v1587, 4
        %v1589 = vrot.slane %v1332, 5
        %v1590 = vsel %vm600, %v1588, %v1589
        %v1591 = vrot.slane %v1549, 5
        %v1592 = vrot.slane %v1591, 4
        %v1593 = vrot.slane %v1334, 5
        %v1594 = vsel %vm600, %v1592, %v1593
        %v1595 = vrot.slane %v1550, 5
        %v1596 = vrot.slane %v1595, 4
        %v1597 = vrot.slane %v1336, 5
        %v1598 = vsel %vm600, %v1596, %v1597
        %s1599 = scalar_lea.vmem [#allocation2], 256
        %v1600 = vld [vmem:[%s1599] sm:$0xf]
        %v1601 = vld [vmem:[%s1599 + $0x4] sm:$0xf]
        %v1602 = vld [vmem:[%s1599 + $0x8] sm:$0xf]
        %v1603 = vld [vmem:[%s1599 + $0xc] sm:$0xf]
        %v1604 = vld [vmem:[%s1599 + $0x10] sm:$0xf]
        %v1605 = vld [vmem:[%s1599 + $0x14] sm:$0xf]
        %v1606 = vld [vmem:[%s1599 + $0x18] sm:$0xf]
        %v1607 = vld [vmem:[%s1599 + $0x1c] sm:$0xf]
        %v1608 = vunpack.c.l.b16 %v1570
        %v1609 = vunpack.c.l.b16 %v1574
        %v1610 = vunpack.c.l.b16 %v1578
        %v1611 = vunpack.c.l.b16 %v1582
        %v1612 = vunpack.c.l.b16 %v1586
        %v1613 = vunpack.c.l.b16 %v1590
        %v1614 = vunpack.c.l.b16 %v1594
        %v1615 = vunpack.c.l.b16 %v1598
        %v1616 = vpack.c.b16 %v1609, %v1608
        %v1617 = vpack.c.b16 %v1611, %v1610
        %v1618 = vpack.c.b16 %v1613, %v1612
        %v1619 = vpack.c.b16 %v1615, %v1614
        %v1628 = vunpack.c.l.b16 %v1600
        %v1629 = vunpack.c.l.b16 %v1601
        %v1630 = vunpack.c.l.b16 %v1602
        %v1631 = vunpack.c.l.b16 %v1603
        %v1632 = vunpack.c.l.b16 %v1604
        %v1633 = vunpack.c.l.b16 %v1605
        %v1634 = vunpack.c.l.b16 %v1606
        %v1635 = vunpack.c.l.b16 %v1607
        %v1636 = vpack.c.b16 %v1629, %v1628
        %v1637 = vpack.c.b16 %v1631, %v1630
        %v1638 = vpack.c.b16 %v1633, %v1632
        %v1639 = vpack.c.b16 %v1635, %v1634
        %v1645 = vsel %vm447, %v1616, 0
        %v1648 = vsel %vm447, %v1617, 0
        %v1651 = vsel %vm447, %v1618, 0
        %v1654 = vsel %vm447, %v1619, 0
        %1656 = vmatpush.bf16.msra.mxu0 0
        %1657 = vmatpush.bf16.msra.mxu0 0
        %1658 = vmatpush.bf16.msra.mxu0 0
        %1659 = vmatpush.bf16.msra.mxu0 0
        %1660 = vmatpush.bf16.msra.mxu0 %v1639
        %1661 = vmatpush.bf16.msra.mxu0 %v1638
        %1662 = vmatpush.bf16.msra.mxu0 %v1637
        %1663 = vmatpush.bf16.msra.mxu0 %v1636
        %1664 = vmatmul.bf16.gmra.mxu0 %v1645
        %v1665 = vpop.f32.mrf.mxu0
        %v1666 = vadd.f32 0.0, %v1665
        %v1667 = vpop.f32.mrf.mxu0
        %v1668 = vadd.f32 0.0, %v1667
        %1669 = vmatmul.bf16.gmra.mxu0 %v1648
        %v1670 = vpop.f32.mrf.mxu0
        %v1671 = vadd.f32 0.0, %v1670
        %v1672 = vpop.f32.mrf.mxu0
        %v1673 = vadd.f32 0.0, %v1672
        %1674 = vmatmul.bf16.gmra.mxu0 %v1651
        %v1675 = vpop.f32.mrf.mxu0
        %v1676 = vadd.f32 0.0, %v1675
        %v1677 = vpop.f32.mrf.mxu0
        %v1678 = vadd.f32 0.0, %v1677
        %1679 = vmatmul.bf16.gmra.mxu0 %v1654
        %v1680 = vpop.f32.mrf.mxu0
        %v1681 = vadd.f32 0.0, %v1680
        %v1682 = vpop.f32.mrf.mxu0
        %v1683 = vadd.f32 0.0, %v1682
        %1684 = vdwg.mxu0
        %v1685 = vadd.f32 %v1535, %v1666
        %v1686 = vadd.f32 %v1536, %v1668
        %v1687 = vadd.f32 %v1537, %v1671
        %v1688 = vadd.f32 %v1538, %v1673
        %v1689 = vadd.f32 %v1539, %v1676
        %v1690 = vadd.f32 %v1540, %v1678
        %v1691 = vadd.f32 %v1541, %v1681
        %v1692 = vadd.f32 %v1542, %v1683
        %v1693 = vld [vmem:[%s258] sm:$0x1]
        %v1695 = vperm.slane %v1693, 0
        %v1697 = vmul.f32 %v1685, %v1695
        %v1698 = vmul.f32 %v1686, %v1695
        %v1699 = vmul.f32 %v1687, %v1695
        %v1700 = vmul.f32 %v1688, %v1695
        %v1701 = vmul.f32 %v1689, %v1695
        %v1702 = vmul.f32 %v1690, %v1695
        %v1703 = vmul.f32 %v1691, %v1695
        %v1704 = vmul.f32 %v1692, %v1695
        %v1705 = vld [vmem:[%s261] sm:$0x1]
        %v1707 = vperm.slane %v1705, 0
        %v1709 = vadd.f32 %v1697, %v1707
        %v1710 = vadd.f32 %v1698, %v1707
        %v1711 = vadd.f32 %v1699, %v1707
        %v1712 = vadd.f32 %v1700, %v1707
        %v1713 = vadd.f32 %v1701, %v1707
        %v1714 = vadd.f32 %v1702, %v1707
        %v1715 = vadd.f32 %v1703, %v1707
        %v1716 = vadd.f32 %v1704, %v1707
        %v1717 = vmax.f32 %v1709, 0.0
        %v1718 = vmax.f32 %v1710, 0.0
        %v1719 = vmax.f32 %v1711, 0.0
        %v1720 = vmax.f32 %v1712, 0.0
        %v1721 = vmax.f32 %v1713, 0.0
        %v1722 = vmax.f32 %v1714, 0.0
        %v1723 = vmax.f32 %v1715, 0.0
        %v1724 = vmax.f32 %v1716, 0.0
        %v1725 = vpack.c.bf16 %v1717, %v1717
        %v1726 = vpack.c.bf16 %v1718, %v1718
        %v1727 = vpack.c.bf16 %v1719, %v1719
        %v1728 = vpack.c.bf16 %v1720, %v1720
        %v1729 = vpack.c.bf16 %v1721, %v1721
        %v1730 = vpack.c.bf16 %v1722, %v1722
        %v1731 = vpack.c.bf16 %v1723, %v1723
        %v1732 = vpack.c.bf16 %v1724, %v1724
        %1733 = vst [vmem:[%s250] sm:$0xf] %v1725
        %1734 = vst [vmem:[%s250 + $0x4] sm:$0xf] %v1726
        %1735 = vst [vmem:[%s250 + $0x8] sm:$0xf] %v1727
        %1736 = vst [vmem:[%s250 + $0xc] sm:$0xf] %v1728
        %1737 = vst [vmem:[%s250 + $0x10] sm:$0xf] %v1729
        %1738 = vst [vmem:[%s250 + $0x14] sm:$0xf] %v1730
        %1739 = vst [vmem:[%s250 + $0x18] sm:$0xf] %v1731
        %1740 = vst [vmem:[%s250 + $0x1c] sm:$0xf] %v1732
        %s1741 = sand.u32 %s145, 1
        %s1742 = scalar_lea.sflag [#allocation4], %s1741
        %s1743 = sand.u32 %s145, 1
        %s1744 = smul.addr %s1743, 32
        %s1745 = scalar_lea.vmem [#allocation5], %s1744
        // Predicated region
        $region41: #{tpu_custom_call.1} parent=35 // pred_check
          %p1746 = pneg %p155
        $region42: #{tpu_custom_call.1} parent=35 // pred_check_branch
          %1748 = sbr.rel (%p1746) target = $region44
        $region43: #{tpu_custom_call.1} parent=35 // pred_region
          %1750 = vsyncadd %s1742, 0
          %s1751 = smul.addr %s24, 8
          %s1752 = sadd.s32 %s23, %s1751
          %s1753 = smul.addr %s1752, 4
          %s1754 = scalar_lea.hbm %s4, %s1753
          %s1755 = sshll.u32 %s1745, 4
          %s1756 = int_to_ptr.vmem [resolvable:$true] %s1755
          %s1757 = sshll.u32 %s1754, 4
          %s1758 = int_to_ptr.hbm [resolvable:$true] %s1757
          %1763 = dma.vmem_to_hbm [thread:$0]  %s1756, 512, %s1758, %s1742, 64, 64, 4
        $region44: #{tpu_custom_call.1} parent=35 // pred_fallthru
          _
      $region36: #{tpu_custom_call.1} parent=5 // pred_fallthru
        _
      %p1764 = scmp.le.s32.totalorder 2, %s14
      // Predicated region
      $region45: #{tpu_custom_call.1} parent=5 // pred_check
        %p1765 = pneg %p1764
      $region46: #{tpu_custom_call.1} parent=5 // pred_check_branch
        %1767 = sbr.rel (%p1765) target = $region48
      $region47: #{tpu_custom_call.1} parent=5 // pred_region
        %s1768 = ssub.s32 %s14, 2
        // Predicated region
        $region49: #{tpu_custom_call.1} parent=47 // pred_check
          %p1769 = pneg %p161
        $region50: #{tpu_custom_call.1} parent=47 // pred_check_branch
          %1771 = sbr.rel (%p1769) target = $region52
        $region51: #{tpu_custom_call.1} parent=47 // pred_region
          %s1772 = sand.u32 %s146, 1
          %s1773 = scalar_lea.sflag [#allocation4], %s1772
          %s1774 = sand.u32 %s146, 1
          %s1775 = smul.addr %s1774, 32
          %s1776 = scalar_lea.vmem [#allocation5], %s1775
          %1778 = dma.done %s1773, 512
        $region52: #{tpu_custom_call.1} parent=47 // pred_fallthru
          _
      $region48: #{tpu_custom_call.1} parent=5 // pred_fallthru
        _
    $region6: #{tpu_custom_call.1} parent=1 // loop_footer
      %s18 = sadd.s32 1, %s14
    $region7: #{tpu_custom_call.1} parent=1 // loop_footer_branch
      %13 = sbr.rel target = $region3
    $region8: #{tpu_custom_call.1} parent=1 // loop_exit
      _
    %1779 = vsyncpa [#allocation3], 1
    %s1780 = scalar_lea.sflag [#allocation3], 1
    %1781 = vsyncpa %s1780, 1
    %1782 = vsyncpa [#allocation4], 1
    %s1783 = scalar_lea.sflag [#allocation4], 1
    %1784 = vsyncpa %s1783, 1

</llo_original>
